<compile_context>
chip_gen: v7x
topology: tpu7x:2x2x1
jax: 0.10.0
libtpu: 0.0.40
codegen_flags: <defaults>
</compile_context>

<pallas_src>
import functools
import itertools

import numpy as np
import jax
import jax.numpy as jnp
from jax.experimental import pallas as pl
from jax.experimental.pallas import tpu as pltpu


# ------------------------------ Pallas kernel -------------------------------

def drrn_kernel(emb_ref, len_ref, wih_ref, whh_ref, bgi_ref, bhn_ref,
                w1_ref, b1_ref, w2_ref, b2_ref, q_ref, *, T, R, H):
    """Fused DRRN forward: 4 GRU streams as ONE block-diagonal recurrence + MLP scorer.

    emb_ref : (T*R, 4E)   lane-banded embeddings (band s = stream s, per-action rows)
    len_ref : (R, 4H)     int32 sequence lengths broadcast over each stream band
    wih_ref : (4E, 12H)   fused input projection (gate-major / stream-minor columns)
    whh_ref : (4H, 12H)   block-diagonal fused recurrent weights
    bgi_ref : (1, 12H)    b_ih (+ b_hr / b_hz folded in)
    bhn_ref : (1, 4H)     b_hn (must stay inside r * (...))
    w1_ref  : (4H, H)     hidden layer, pre-transposed
    b1_ref  : (1, H)
    w2_ref  : (1, H)      act_scorer as a row
    b2_ref  : (1, 1)
    q_ref   : (1, >=128)  lane-dense q-value row (first n_act lanes valid)
    """
    F = 4 * H

    # Hoisted input projection for ALL streams / timesteps: one MXU matmul.
    gi = jnp.dot(emb_ref[...], wih_ref[...],
                 preferred_element_type=jnp.float32) + bgi_ref[...]     # (T*R, 3F)
    gi = gi.reshape(T, R, 3 * F)          # leading-axis indexing -> tile-aligned slices

    whh = whh_ref[...]
    bhn = bhn_ref[...]
    lens = len_ref[...]

    h = jnp.zeros((R, F), jnp.float32)
    # Short fixed trip count -> fully unrolled static loop; only gh is serial.
    for t in range(T):
        g = gi[t]                                                        # (R, 3F)
        gh = jnp.dot(h, whh, preferred_element_type=jnp.float32)         # (R, 3F)
        # PyTorch GRU gate order [r, z, n]; gate bands are 128-lane aligned.
        r = jax.nn.sigmoid(g[:, :F] + gh[:, :F])
        z = jax.nn.sigmoid(g[:, F:2 * F] + gh[:, F:2 * F])
        n = jnp.tanh(g[:, 2 * F:] + r * (gh[:, 2 * F:] + bhn))
        h_new = n + z * (h - n)                                          # == (1-z)*n + z*h
        h = jnp.where(lens > t, h_new, h)                                # length mask

    # Hidden layer: row j of h already holds [obs|look|inv|act] for action j.
    hdn = jnp.maximum(
        jnp.dot(h, w1_ref[...], preferred_element_type=jnp.float32) + b1_ref[...], 0.0)

    # act_scorer as a lane-dense row: contract H of (1,H) with H of (R,H) -> (1,R).
    q = jax.lax.dot_general(w2_ref[...], hdn,
                            dimension_numbers=(((1,), (1,)), ((), ())),
                            preferred_element_type=jnp.float32) + b2_ref[...]
    pad = q_ref.shape[1] - R
    if pad > 0:
        q = jnp.concatenate([q, jnp.zeros((1, pad), jnp.float32)], axis=-1)
    q_ref[...] = q


# ------------------------------ one-time weight prep -------------------------

def _round_up(x, m):
    return (x + m - 1) // m * m


def init_gru_params(key, E, H):
    k1, k2, k3, k4 = jax.random.split(key, 4)
    s = 1.0 / np.sqrt(H)
    return (
        jax.random.uniform(k1, (E, 3 * H), jnp.float32, -s, s),   # W_ih^T
        jax.random.uniform(k2, (H, 3 * H), jnp.float32, -s, s),   # W_hh^T
        jax.random.uniform(k3, (1, 3 * H), jnp.float32, -s, s),   # b_ih
        jax.random.uniform(k4, (1, 3 * H), jnp.float32, -s, s),   # b_hh
    )


def init_params(key, vocab_size, E, H):
    ks = jax.random.split(key, 8)
    p = {
        "emb": jax.random.normal(ks[0], (vocab_size, E), jnp.float32) * 0.1,
        "obs": init_gru_params(ks[1], E, H),
        "look": init_gru_params(ks[2], E, H),
        "inv": init_gru_params(ks[3], E, H),
        "act": init_gru_params(ks[4], E, H),
    }
    s1 = 1.0 / np.sqrt(4 * H)
    p["w1"] = jax.random.uniform(ks[5], (4 * H, H), jnp.float32, -s1, s1)
    p["b1"] = jax.random.uniform(ks[6], (1, H), jnp.float32, -s1, s1)
    s2 = 1.0 / np.sqrt(H)
    p["w2"] = jax.random.uniform(ks[7], (H, 1), jnp.float32, -s2, s2)
    p["b2"] = jnp.zeros((1, 1), jnp.float32)
    return p


def fuse_params(params):
    """One-time weight plumbing (hoisted out of the per-call path)."""
    order = ("obs", "look", "inv", "act")
    E = params["emb"].shape[1]
    H = params["w1"].shape[1]
    F = 4 * H
    wih_f = np.zeros((4 * E, 3 * F), np.float32)
    whh_f = np.zeros((F, 3 * F), np.float32)
    bgi = np.zeros((1, 3 * F), np.float32)
    bhn = np.zeros((1, F), np.float32)
    for s, name in enumerate(order):
        wih_t, whh_t, b_ih, b_hh = [np.asarray(a) for a in params[name]]
        for g in range(3):                               # gates [r, z, n]
            cols = slice(g * F + s * H, g * F + (s + 1) * H)
            wih_f[s * E:(s + 1) * E, cols] = wih_t[:, g * H:(g + 1) * H]
            whh_f[s * H:(s + 1) * H, cols] = whh_t[:, g * H:(g + 1) * H]
            bgi[0, cols] = b_ih[0, g * H:(g + 1) * H]
            if g < 2:                                    # fold b_hr / b_hz only
                bgi[0, cols] += b_hh[0, g * H:(g + 1) * H]
        bhn[0, s * H:(s + 1) * H] = b_hh[0, 2 * H:3 * H]
    return {"wih": jnp.asarray(wih_f), "whh": jnp.asarray(whh_f),
            "bgi": jnp.asarray(bgi), "bhn": jnp.asarray(bhn),
            "w1": params["w1"], "b1": params["b1"],
            "w2": jnp.transpose(params["w2"]), "b2": params["b2"]}


# ------------------------------- per-call glue -------------------------------

def pack_inputs(obs_seqs, look_seqs, inv_seqs, act_seqs, act_sizes, H):
    """Host-side packing into the lane-banded layout (replicates states per action)."""
    rep = np.repeat(np.arange(len(act_sizes)), np.asarray(act_sizes))
    streams = [[obs_seqs[i] for i in rep],
               [look_seqs[i] for i in rep],
               [inv_seqs[i] for i in rep],
               list(act_seqs)]
    n_act = int(np.sum(act_sizes))
    T = max(len(s) for st in streams for s in st)
    R = max(8, _round_up(n_act, 8))
    ids = np.zeros((T, R, 4), np.int32)
    lens = np.zeros((R, 4), np.int32)
    for s, st in enumerate(streams):
        for j, seq in enumerate(st):
            ids[:len(seq), j, s] = np.asarray(seq, np.int32)
            lens[j, s] = len(seq)
    lens_b = np.repeat(lens, H, axis=1)                  # (R, 4H) length per stream band
    return jnp.asarray(ids), jnp.asarray(lens_b), T, R, n_act


@functools.partial(jax.jit, static_argnames=("T", "R", "H", "n_act"))
def _drrn_forward_core(emb_table, fused, ids, lens_b, *, T, R, H, n_act):
    E = emb_table.shape[1]
    # Embedding gather straight into the lane-banded layout: (T, R, 4, E) -> (T*R, 4E).
    emb = emb_table[ids].reshape(T, R, 4 * E).reshape(T * R, 4 * E)
    qw = max(128, _round_up(R, 128))                     # lane-dense output row

    flops = (2 * T * R * (4 * E) * (12 * H)              # hoisted input projection
             + T * 2 * R * (4 * H) * (12 * H)            # recurrence
             + 2 * R * (4 * H) * H + 2 * R * H)          # hidden + scorer
    transc = T * R * 12 * H
    nbytes = (emb.size + lens_b.size
              + sum(int(np.prod(v.shape)) for v in fused.values())) * 4 + qw * 4

    q_row = pl.pallas_call(
        functools.partial(drrn_kernel, T=T, R=R, H=H),
        out_shape=jax.ShapeDtypeStruct((1, qw), jnp.float32),
        in_specs=[pl.BlockSpec(memory_space=pltpu.MemorySpace.VMEM) for _ in range(10)],
        out_specs=pl.BlockSpec(memory_space=pltpu.MemorySpace.VMEM),
        cost_estimate=pl.CostEstimate(flops=flops, transcendentals=transc,
                                      bytes_accessed=nbytes),
    )(emb, lens_b,
      fused["wih"], fused["whh"], fused["bgi"], fused["bhn"],
      fused["w1"], fused["b1"], fused["w2"], fused["b2"])
    return q_row[0, :n_act]


def drrn_forward(emb_table, fused, obs_seqs, look_seqs, inv_seqs, act_batch):
    """Returns (q_values, cond_probs) matching DRRN.forward with cclm=None."""
    act_sizes = [len(a) for a in act_batch]
    act_seqs = list(itertools.chain.from_iterable(act_batch))
    H = fused["w1"].shape[1]
    ids, lens_b, T, R, n_act = pack_inputs(obs_seqs, look_seqs, inv_seqs,
                                           act_seqs, act_sizes, H)
    q = _drrn_forward_core(emb_table, fused, ids, lens_b, T=T, R=R, H=H, n_act=n_act)
    splits = [int(x) for x in np.cumsum(act_sizes)[:-1]]
    q_values = jnp.split(q, splits)
    # cclm is None -> cond_probs = q_values.
    # TODO(synk): cclm / adaptive_cond_weight / detach / act() sampling are external-model
    # host-side control flow, not a kernel.
    return q_values, q_values


# ----------------------------- pure-JAX reference ---------------------------

def _gru_ref(p, emb_table, seqs):
    wih_t, whh_t, bih, bhh = p
    H = whh_t.shape[0]
    B = len(seqs)
    T = max(len(s) for s in seqs)
    ids = np.zeros((B, T), np.int32)
    lengths = np.zeros((B,), np.int32)
    for i, s in enumerate(seqs):
        ids[i, :len(s)] = np.asarray(s, np.int32)
        lengths[i] = len(s)
    e = emb_table[jnp.asarray(ids)]
    lengths = jnp.asarray(lengths)
    h = jnp.zeros((B, H), jnp.float32)
    for t in range(T):
        gi = e[:, t] @ wih_t + bih
        gh = h @ whh_t + bhh
        r = jax.nn.sigmoid(gi[:, :H] + gh[:, :H])
        z = jax.nn.sigmoid(gi[:, H:2 * H] + gh[:, H:2 * H])
        n = jnp.tanh(gi[:, 2 * H:] + r * gh[:, 2 * H:])
        h_new = (1.0 - z) * n + z * h
        m = (t < lengths).astype(jnp.float32)[:, None]
        h = m * h_new + (1.0 - m) * h
    return h


def _forward_ref(params, obs_seqs, look_seqs, inv_seqs, act_batch):
    act_sizes = [len(a) for a in act_batch]
    act_seqs = list(itertools.chain.from_iterable(act_batch))
    emb = params["emb"]
    ho = _gru_ref(params["obs"], emb, obs_seqs)
    hl = _gru_ref(params["look"], emb, look_seqs)
    hi = _gru_ref(params["inv"], emb, inv_seqs)
    ha = _gru_ref(params["act"], emb, act_seqs)
    so = jnp.concatenate([ho, hl, hi], axis=1)
    rep = np.repeat(np.arange(len(act_sizes)), np.asarray(act_sizes))
    z = jnp.concatenate([so[jnp.asarray(rep)], ha], axis=1)
    hdn = jnp.maximum(z @ params["w1"] + params["b1"], 0.0)
    return (hdn @ params["w2"] + params["b2"])[:, 0]


# ----------------------------------- main ------------------------------------

if __name__ == "__main__":
    vocab_size, embedding_dim, hidden_dim = 100, 32, 32
    key = jax.random.PRNGKey(0)
    pkey, dkey = jax.random.split(key)
    params = init_params(pkey, vocab_size, embedding_dim, hidden_dim)
    fused = fuse_params(params)                    # one-time weight plumbing

    # Deterministic token pool for building variable-length sequences.
    tok = np.asarray(jax.random.randint(dkey, (256,), 1, vocab_size), dtype=np.int32)
    cursor = [0]

    def take(n):
        s = tok[cursor[0]:cursor[0] + n].tolist()
        cursor[0] += n
        return s

    # 2 states; obs/description/inventory per state; admissible actions sizes [2, 3].
    obs_seqs = [take(5), take(7)]
    look_seqs = [take(3), take(6)]
    inv_seqs = [take(4), take(2)]
    act_batch = [[take(4), take(6)], [take(3), take(5), take(2)]]
    act_sizes = [len(a) for a in act_batch]

    q_values, cond_probs = drrn_forward(params["emb"], fused,
                                        obs_seqs, look_seqs, inv_seqs, act_batch)
    q_flat = jax.block_until_ready(jnp.concatenate(q_values))

    q_ref = _forward_ref(params, obs_seqs, look_seqs, inv_seqs, act_batch)
    np.testing.assert_allclose(np.asarray(q_flat), np.asarray(q_ref),
                               rtol=1e-5, atol=1e-5)
    assert [int(v.shape[0]) for v in q_values] == act_sizes

    print("KERNEL_OK")
</pallas_src>

<mosaic_0001>
module attributes {stable_mosaic.version = 11 : i64} {
  func.func @drrn_kernel(%arg0: memref<56x128xf32, #tpu.memory_space<vmem>>, %arg1: memref<8x128xi32, #tpu.memory_space<vmem>>, %arg2: memref<128x384xf32, #tpu.memory_space<vmem>>, %arg3: memref<128x384xf32, #tpu.memory_space<vmem>>, %arg4: memref<1x384xf32, #tpu.memory_space<vmem>>, %arg5: memref<1x128xf32, #tpu.memory_space<vmem>>, %arg6: memref<128x32xf32, #tpu.memory_space<vmem>>, %arg7: memref<1x32xf32, #tpu.memory_space<vmem>>, %arg8: memref<1x32xf32, #tpu.memory_space<vmem>>, %arg9: memref<1x1xf32, #tpu.memory_space<vmem>>, %arg10: memref<1x128xf32, #tpu.memory_space<vmem>>) attributes {dimension_semantics = [], scalar_prefetch = 0 : i64, scratch_operands = 0 : i64, tpu.core_type = #tpu.core_type<tc>} {
    %c0 = arith.constant 0 : index
    %c0_0 = arith.constant 0 : index
    %0 = vector.load %arg0[%c0, %c0_0] : memref<56x128xf32, #tpu.memory_space<vmem>>, vector<56x128xf32>
    %c0_1 = arith.constant 0 : index
    %c0_2 = arith.constant 0 : index
    %1 = vector.load %arg2[%c0_1, %c0_2] : memref<128x384xf32, #tpu.memory_space<vmem>>, vector<128x384xf32>
    %cst = arith.constant dense<0.000000e+00> : vector<56x384xf32>
    %2 = tpu.matmul %0, %1, %cst {dimension_numbers = #tpu.dot_dimension_numbers<[1], [0], [0], [1], [0, 0, 1, 1], [], []>} : vector<56x128xf32>, vector<128x384xf32>, vector<56x384xf32> -> vector<56x384xf32>
    %c0_3 = arith.constant 0 : index
    %c0_4 = arith.constant 0 : index
    %3 = vector.load %arg4[%c0_3, %c0_4] : memref<1x384xf32, #tpu.memory_space<vmem>>, vector<1x384xf32>
    %4 = vector.broadcast %3 : vector<1x384xf32> to vector<56x384xf32>
    %5 = arith.addf %2, %4 : vector<56x384xf32>
    %6 = vector.shape_cast %5 : vector<56x384xf32> to vector<7x8x384xf32>
    %c0_5 = arith.constant 0 : index
    %c0_6 = arith.constant 0 : index
    %7 = vector.load %arg3[%c0_5, %c0_6] : memref<128x384xf32, #tpu.memory_space<vmem>>, vector<128x384xf32>
    %c0_7 = arith.constant 0 : index
    %c0_8 = arith.constant 0 : index
    %8 = vector.load %arg5[%c0_7, %c0_8] : memref<1x128xf32, #tpu.memory_space<vmem>>, vector<1x128xf32>
    %c0_9 = arith.constant 0 : index
    %c0_10 = arith.constant 0 : index
    %9 = vector.load %arg1[%c0_9, %c0_10] : memref<8x128xi32, #tpu.memory_space<vmem>>, vector<8x128xi32>
    %cst_11 = arith.constant 0.000000e+00 : f32
    %10 = vector.broadcast %cst_11 : f32 to vector<8x128xf32>
    %11 = vector.extract_strided_slice %6 {offsets = [0, 0, 0], sizes = [1, 8, 384], strides = [1, 1, 1]} : vector<7x8x384xf32> to vector<1x8x384xf32>
    %12 = vector.shape_cast %11 : vector<1x8x384xf32> to vector<8x384xf32>
    %cst_12 = arith.constant dense<0.000000e+00> : vector<8x384xf32>
    %13 = tpu.matmul %10, %7, %cst_12 {dimension_numbers = #tpu.dot_dimension_numbers<[1], [0], [0], [1], [0, 0, 1, 1], [], []>} : vector<8x128xf32>, vector<128x384xf32>, vector<8x384xf32> -> vector<8x384xf32>
    %14 = vector.extract_strided_slice %12 {offsets = [0, 0], sizes = [8, 128], strides = [1, 1]} : vector<8x384xf32> to vector<8x128xf32>
    %15 = vector.extract_strided_slice %13 {offsets = [0, 0], sizes = [8, 128], strides = [1, 1]} : vector<8x384xf32> to vector<8x128xf32>
    %16 = arith.addf %14, %15 : vector<8x128xf32>
    %17 = arith.negf %16 : vector<8x128xf32>
    %18 = math.exp %17 : vector<8x128xf32>
    %cst_13 = arith.constant 1.000000e+00 : f32
    %19 = vector.broadcast %cst_13 : f32 to vector<8x128xf32>
    %20 = arith.addf %19, %18 : vector<8x128xf32>
    %21 = arith.divf %19, %20 : vector<8x128xf32>
    %22 = vector.extract_strided_slice %12 {offsets = [0, 128], sizes = [8, 128], strides = [1, 1]} : vector<8x384xf32> to vector<8x128xf32>
    %23 = vector.extract_strided_slice %13 {offsets = [0, 128], sizes = [8, 128], strides = [1, 1]} : vector<8x384xf32> to vector<8x128xf32>
    %24 = arith.addf %22, %23 : vector<8x128xf32>
    %25 = arith.negf %24 : vector<8x128xf32>
    %26 = math.exp %25 : vector<8x128xf32>
    %cst_14 = arith.constant 1.000000e+00 : f32
    %27 = vector.broadcast %cst_14 : f32 to vector<8x128xf32>
    %28 = arith.addf %27, %26 : vector<8x128xf32>
    %29 = arith.divf %27, %28 : vector<8x128xf32>
    %30 = vector.extract_strided_slice %12 {offsets = [0, 256], sizes = [8, 128], strides = [1, 1]} : vector<8x384xf32> to vector<8x128xf32>
    %31 = vector.extract_strided_slice %13 {offsets = [0, 256], sizes = [8, 128], strides = [1, 1]} : vector<8x384xf32> to vector<8x128xf32>
    %32 = vector.broadcast %8 : vector<1x128xf32> to vector<8x128xf32>
    %33 = arith.addf %31, %32 : vector<8x128xf32>
    %34 = arith.mulf %21, %33 : vector<8x128xf32>
    %35 = arith.addf %30, %34 : vector<8x128xf32>
    %36 = math.tanh %35 : vector<8x128xf32>
    %37 = arith.subf %10, %36 : vector<8x128xf32>
    %38 = arith.mulf %29, %37 : vector<8x128xf32>
    %39 = arith.addf %36, %38 : vector<8x128xf32>
    %c0_i32 = arith.constant 0 : i32
    %40 = vector.broadcast %c0_i32 : i32 to vector<8x128xi32>
    %41 = arith.cmpi sgt, %9, %40 : vector<8x128xi32>
    %42 = arith.select %41, %39, %10 : vector<8x128xi1>, vector<8x128xf32>
    %43 = vector.extract_strided_slice %6 {offsets = [1, 0, 0], sizes = [1, 8, 384], strides = [1, 1, 1]} : vector<7x8x384xf32> to vector<1x8x384xf32>
    %44 = vector.shape_cast %43 : vector<1x8x384xf32> to vector<8x384xf32>
    %cst_15 = arith.constant dense<0.000000e+00> : vector<8x384xf32>
    %45 = tpu.matmul %42, %7, %cst_15 {dimension_numbers = #tpu.dot_dimension_numbers<[1], [0], [0], [1], [0, 0, 1, 1], [], []>} : vector<8x128xf32>, vector<128x384xf32>, vector<8x384xf32> -> vector<8x384xf32>
    %46 = vector.extract_strided_slice %44 {offsets = [0, 0], sizes = [8, 128], strides = [1, 1]} : vector<8x384xf32> to vector<8x128xf32>
    %47 = vector.extract_strided_slice %45 {offsets = [0, 0], sizes = [8, 128], strides = [1, 1]} : vector<8x384xf32> to vector<8x128xf32>
    %48 = arith.addf %46, %47 : vector<8x128xf32>
    %49 = arith.negf %48 : vector<8x128xf32>
    %50 = math.exp %49 : vector<8x128xf32>
    %cst_16 = arith.constant 1.000000e+00 : f32
    %51 = vector.broadcast %cst_16 : f32 to vector<8x128xf32>
    %52 = arith.addf %51, %50 : vector<8x128xf32>
    %53 = arith.divf %51, %52 : vector<8x128xf32>
    %54 = vector.extract_strided_slice %44 {offsets = [0, 128], sizes = [8, 128], strides = [1, 1]} : vector<8x384xf32> to vector<8x128xf32>
    %55 = vector.extract_strided_slice %45 {offsets = [0, 128], sizes = [8, 128], strides = [1, 1]} : vector<8x384xf32> to vector<8x128xf32>
    %56 = arith.addf %54, %55 : vector<8x128xf32>
    %57 = arith.negf %56 : vector<8x128xf32>
    %58 = math.exp %57 : vector<8x128xf32>
    %cst_17 = arith.constant 1.000000e+00 : f32
    %59 = vector.broadcast %cst_17 : f32 to vector<8x128xf32>
    %60 = arith.addf %59, %58 : vector<8x128xf32>
    %61 = arith.divf %59, %60 : vector<8x128xf32>
    %62 = vector.extract_strided_slice %44 {offsets = [0, 256], sizes = [8, 128], strides = [1, 1]} : vector<8x384xf32> to vector<8x128xf32>
    %63 = vector.extract_strided_slice %45 {offsets = [0, 256], sizes = [8, 128], strides = [1, 1]} : vector<8x384xf32> to vector<8x128xf32>
    %64 = vector.broadcast %8 : vector<1x128xf32> to vector<8x128xf32>
    %65 = arith.addf %63, %64 : vector<8x128xf32>
    %66 = arith.mulf %53, %65 : vector<8x128xf32>
    %67 = arith.addf %62, %66 : vector<8x128xf32>
    %68 = math.tanh %67 : vector<8x128xf32>
    %69 = arith.subf %42, %68 : vector<8x128xf32>
    %70 = arith.mulf %61, %69 : vector<8x128xf32>
    %71 = arith.addf %68, %70 : vector<8x128xf32>
    %c1_i32 = arith.constant 1 : i32
    %72 = vector.broadcast %c1_i32 : i32 to vector<8x128xi32>
    %73 = arith.cmpi sgt, %9, %72 : vector<8x128xi32>
    %74 = arith.select %73, %71, %42 : vector<8x128xi1>, vector<8x128xf32>
    %75 = vector.extract_strided_slice %6 {offsets = [2, 0, 0], sizes = [1, 8, 384], strides = [1, 1, 1]} : vector<7x8x384xf32> to vector<1x8x384xf32>
    %76 = vector.shape_cast %75 : vector<1x8x384xf32> to vector<8x384xf32>
    %cst_18 = arith.constant dense<0.000000e+00> : vector<8x384xf32>
    %77 = tpu.matmul %74, %7, %cst_18 {dimension_numbers = #tpu.dot_dimension_numbers<[1], [0], [0], [1], [0, 0, 1, 1], [], []>} : vector<8x128xf32>, vector<128x384xf32>, vector<8x384xf32> -> vector<8x384xf32>
    %78 = vector.extract_strided_slice %76 {offsets = [0, 0], sizes = [8, 128], strides = [1, 1]} : vector<8x384xf32> to vector<8x128xf32>
    %79 = vector.extract_strided_slice %77 {offsets = [0, 0], sizes = [8, 128], strides = [1, 1]} : vector<8x384xf32> to vector<8x128xf32>
    %80 = arith.addf %78, %79 : vector<8x128xf32>
    %81 = arith.negf %80 : vector<8x128xf32>
    %82 = math.exp %81 : vector<8x128xf32>
    %cst_19 = arith.constant 1.000000e+00 : f32
    %83 = vector.broadcast %cst_19 : f32 to vector<8x128xf32>
    %84 = arith.addf %83, %82 : vector<8x128xf32>
    %85 = arith.divf %83, %84 : vector<8x128xf32>
    %86 = vector.extract_strided_slice %76 {offsets = [0, 128], sizes = [8, 128], strides = [1, 1]} : vector<8x384xf32> to vector<8x128xf32>
    %87 = vector.extract_strided_slice %77 {offsets = [0, 128], sizes = [8, 128], strides = [1, 1]} : vector<8x384xf32> to vector<8x128xf32>
    %88 = arith.addf %86, %87 : vector<8x128xf32>
    %89 = arith.negf %88 : vector<8x128xf32>
    %90 = math.exp %89 : vector<8x128xf32>
    %cst_20 = arith.constant 1.000000e+00 : f32
    %91 = vector.broadcast %cst_20 : f32 to vector<8x128xf32>
    %92 = arith.addf %91, %90 : vector<8x128xf32>
    %93 = arith.divf %91, %92 : vector<8x128xf32>
    %94 = vector.extract_strided_slice %76 {offsets = [0, 256], sizes = [8, 128], strides = [1, 1]} : vector<8x384xf32> to vector<8x128xf32>
    %95 = vector.extract_strided_slice %77 {offsets = [0, 256], sizes = [8, 128], strides = [1, 1]} : vector<8x384xf32> to vector<8x128xf32>
    %96 = vector.broadcast %8 : vector<1x128xf32> to vector<8x128xf32>
    %97 = arith.addf %95, %96 : vector<8x128xf32>
    %98 = arith.mulf %85, %97 : vector<8x128xf32>
    %99 = arith.addf %94, %98 : vector<8x128xf32>
    %100 = math.tanh %99 : vector<8x128xf32>
    %101 = arith.subf %74, %100 : vector<8x128xf32>
    %102 = arith.mulf %93, %101 : vector<8x128xf32>
    %103 = arith.addf %100, %102 : vector<8x128xf32>
    %c2_i32 = arith.constant 2 : i32
    %104 = vector.broadcast %c2_i32 : i32 to vector<8x128xi32>
    %105 = arith.cmpi sgt, %9, %104 : vector<8x128xi32>
    %106 = arith.select %105, %103, %74 : vector<8x128xi1>, vector<8x128xf32>
    %107 = vector.extract_strided_slice %6 {offsets = [3, 0, 0], sizes = [1, 8, 384], strides = [1, 1, 1]} : vector<7x8x384xf32> to vector<1x8x384xf32>
    %108 = vector.shape_cast %107 : vector<1x8x384xf32> to vector<8x384xf32>
    %cst_21 = arith.constant dense<0.000000e+00> : vector<8x384xf32>
    %109 = tpu.matmul %106, %7, %cst_21 {dimension_numbers = #tpu.dot_dimension_numbers<[1], [0], [0], [1], [0, 0, 1, 1], [], []>} : vector<8x128xf32>, vector<128x384xf32>, vector<8x384xf32> -> vector<8x384xf32>
    %110 = vector.extract_strided_slice %108 {offsets = [0, 0], sizes = [8, 128], strides = [1, 1]} : vector<8x384xf32> to vector<8x128xf32>
    %111 = vector.extract_strided_slice %109 {offsets = [0, 0], sizes = [8, 128], strides = [1, 1]} : vector<8x384xf32> to vector<8x128xf32>
    %112 = arith.addf %110, %111 : vector<8x128xf32>
    %113 = arith.negf %112 : vector<8x128xf32>
    %114 = math.exp %113 : vector<8x128xf32>
    %cst_22 = arith.constant 1.000000e+00 : f32
    %115 = vector.broadcast %cst_22 : f32 to vector<8x128xf32>
    %116 = arith.addf %115, %114 : vector<8x128xf32>
    %117 = arith.divf %115, %116 : vector<8x128xf32>
    %118 = vector.extract_strided_slice %108 {offsets = [0, 128], sizes = [8, 128], strides = [1, 1]} : vector<8x384xf32> to vector<8x128xf32>
    %119 = vector.extract_strided_slice %109 {offsets = [0, 128], sizes = [8, 128], strides = [1, 1]} : vector<8x384xf32> to vector<8x128xf32>
    %120 = arith.addf %118, %119 : vector<8x128xf32>
    %121 = arith.negf %120 : vector<8x128xf32>
    %122 = math.exp %121 : vector<8x128xf32>
    %cst_23 = arith.constant 1.000000e+00 : f32
    %123 = vector.broadcast %cst_23 : f32 to vector<8x128xf32>
    %124 = arith.addf %123, %122 : vector<8x128xf32>
    %125 = arith.divf %123, %124 : vector<8x128xf32>
    %126 = vector.extract_strided_slice %108 {offsets = [0, 256], sizes = [8, 128], strides = [1, 1]} : vector<8x384xf32> to vector<8x128xf32>
    %127 = vector.extract_strided_slice %109 {offsets = [0, 256], sizes = [8, 128], strides = [1, 1]} : vector<8x384xf32> to vector<8x128xf32>
    %128 = vector.broadcast %8 : vector<1x128xf32> to vector<8x128xf32>
    %129 = arith.addf %127, %128 : vector<8x128xf32>
    %130 = arith.mulf %117, %129 : vector<8x128xf32>
    %131 = arith.addf %126, %130 : vector<8x128xf32>
    %132 = math.tanh %131 : vector<8x128xf32>
    %133 = arith.subf %106, %132 : vector<8x128xf32>
    %134 = arith.mulf %125, %133 : vector<8x128xf32>
    %135 = arith.addf %132, %134 : vector<8x128xf32>
    %c3_i32 = arith.constant 3 : i32
    %136 = vector.broadcast %c3_i32 : i32 to vector<8x128xi32>
    %137 = arith.cmpi sgt, %9, %136 : vector<8x128xi32>
    %138 = arith.select %137, %135, %106 : vector<8x128xi1>, vector<8x128xf32>
    %139 = vector.extract_strided_slice %6 {offsets = [4, 0, 0], sizes = [1, 8, 384], strides = [1, 1, 1]} : vector<7x8x384xf32> to vector<1x8x384xf32>
    %140 = vector.shape_cast %139 : vector<1x8x384xf32> to vector<8x384xf32>
    %cst_24 = arith.constant dense<0.000000e+00> : vector<8x384xf32>
    %141 = tpu.matmul %138, %7, %cst_24 {dimension_numbers = #tpu.dot_dimension_numbers<[1], [0], [0], [1], [0, 0, 1, 1], [], []>} : vector<8x128xf32>, vector<128x384xf32>, vector<8x384xf32> -> vector<8x384xf32>
    %142 = vector.extract_strided_slice %140 {offsets = [0, 0], sizes = [8, 128], strides = [1, 1]} : vector<8x384xf32> to vector<8x128xf32>
    %143 = vector.extract_strided_slice %141 {offsets = [0, 0], sizes = [8, 128], strides = [1, 1]} : vector<8x384xf32> to vector<8x128xf32>
    %144 = arith.addf %142, %143 : vector<8x128xf32>
    %145 = arith.negf %144 : vector<8x128xf32>
    %146 = math.exp %145 : vector<8x128xf32>
    %cst_25 = arith.constant 1.000000e+00 : f32
    %147 = vector.broadcast %cst_25 : f32 to vector<8x128xf32>
    %148 = arith.addf %147, %146 : vector<8x128xf32>
    %149 = arith.divf %147, %148 : vector<8x128xf32>
    %150 = vector.extract_strided_slice %140 {offsets = [0, 128], sizes = [8, 128], strides = [1, 1]} : vector<8x384xf32> to vector<8x128xf32>
    %151 = vector.extract_strided_slice %141 {offsets = [0, 128], sizes = [8, 128], strides = [1, 1]} : vector<8x384xf32> to vector<8x128xf32>
    %152 = arith.addf %150, %151 : vector<8x128xf32>
    %153 = arith.negf %152 : vector<8x128xf32>
    %154 = math.exp %153 : vector<8x128xf32>
    %cst_26 = arith.constant 1.000000e+00 : f32
    %155 = vector.broadcast %cst_26 : f32 to vector<8x128xf32>
    %156 = arith.addf %155, %154 : vector<8x128xf32>
    %157 = arith.divf %155, %156 : vector<8x128xf32>
    %158 = vector.extract_strided_slice %140 {offsets = [0, 256], sizes = [8, 128], strides = [1, 1]} : vector<8x384xf32> to vector<8x128xf32>
    %159 = vector.extract_strided_slice %141 {offsets = [0, 256], sizes = [8, 128], strides = [1, 1]} : vector<8x384xf32> to vector<8x128xf32>
    %160 = vector.broadcast %8 : vector<1x128xf32> to vector<8x128xf32>
    %161 = arith.addf %159, %160 : vector<8x128xf32>
    %162 = arith.mulf %149, %161 : vector<8x128xf32>
    %163 = arith.addf %158, %162 : vector<8x128xf32>
    %164 = math.tanh %163 : vector<8x128xf32>
    %165 = arith.subf %138, %164 : vector<8x128xf32>
    %166 = arith.mulf %157, %165 : vector<8x128xf32>
    %167 = arith.addf %164, %166 : vector<8x128xf32>
    %c4_i32 = arith.constant 4 : i32
    %168 = vector.broadcast %c4_i32 : i32 to vector<8x128xi32>
    %169 = arith.cmpi sgt, %9, %168 : vector<8x128xi32>
    %170 = arith.select %169, %167, %138 : vector<8x128xi1>, vector<8x128xf32>
    %171 = vector.extract_strided_slice %6 {offsets = [5, 0, 0], sizes = [1, 8, 384], strides = [1, 1, 1]} : vector<7x8x384xf32> to vector<1x8x384xf32>
    %172 = vector.shape_cast %171 : vector<1x8x384xf32> to vector<8x384xf32>
    %cst_27 = arith.constant dense<0.000000e+00> : vector<8x384xf32>
    %173 = tpu.matmul %170, %7, %cst_27 {dimension_numbers = #tpu.dot_dimension_numbers<[1], [0], [0], [1], [0, 0, 1, 1], [], []>} : vector<8x128xf32>, vector<128x384xf32>, vector<8x384xf32> -> vector<8x384xf32>
    %174 = vector.extract_strided_slice %172 {offsets = [0, 0], sizes = [8, 128], strides = [1, 1]} : vector<8x384xf32> to vector<8x128xf32>
    %175 = vector.extract_strided_slice %173 {offsets = [0, 0], sizes = [8, 128], strides = [1, 1]} : vector<8x384xf32> to vector<8x128xf32>
    %176 = arith.addf %174, %175 : vector<8x128xf32>
    %177 = arith.negf %176 : vector<8x128xf32>
    %178 = math.exp %177 : vector<8x128xf32>
    %cst_28 = arith.constant 1.000000e+00 : f32
    %179 = vector.broadcast %cst_28 : f32 to vector<8x128xf32>
    %180 = arith.addf %179, %178 : vector<8x128xf32>
    %181 = arith.divf %179, %180 : vector<8x128xf32>
    %182 = vector.extract_strided_slice %172 {offsets = [0, 128], sizes = [8, 128], strides = [1, 1]} : vector<8x384xf32> to vector<8x128xf32>
    %183 = vector.extract_strided_slice %173 {offsets = [0, 128], sizes = [8, 128], strides = [1, 1]} : vector<8x384xf32> to vector<8x128xf32>
    %184 = arith.addf %182, %183 : vector<8x128xf32>
    %185 = arith.negf %184 : vector<8x128xf32>
    %186 = math.exp %185 : vector<8x128xf32>
    %cst_29 = arith.constant 1.000000e+00 : f32
    %187 = vector.broadcast %cst_29 : f32 to vector<8x128xf32>
    %188 = arith.addf %187, %186 : vector<8x128xf32>
    %189 = arith.divf %187, %188 : vector<8x128xf32>
    %190 = vector.extract_strided_slice %172 {offsets = [0, 256], sizes = [8, 128], strides = [1, 1]} : vector<8x384xf32> to vector<8x128xf32>
    %191 = vector.extract_strided_slice %173 {offsets = [0, 256], sizes = [8, 128], strides = [1, 1]} : vector<8x384xf32> to vector<8x128xf32>
    %192 = vector.broadcast %8 : vector<1x128xf32> to vector<8x128xf32>
    %193 = arith.addf %191, %192 : vector<8x128xf32>
    %194 = arith.mulf %181, %193 : vector<8x128xf32>
    %195 = arith.addf %190, %194 : vector<8x128xf32>
    %196 = math.tanh %195 : vector<8x128xf32>
    %197 = arith.subf %170, %196 : vector<8x128xf32>
    %198 = arith.mulf %189, %197 : vector<8x128xf32>
    %199 = arith.addf %196, %198 : vector<8x128xf32>
    %c5_i32 = arith.constant 5 : i32
    %200 = vector.broadcast %c5_i32 : i32 to vector<8x128xi32>
    %201 = arith.cmpi sgt, %9, %200 : vector<8x128xi32>
    %202 = arith.select %201, %199, %170 : vector<8x128xi1>, vector<8x128xf32>
    %203 = vector.extract_strided_slice %6 {offsets = [6, 0, 0], sizes = [1, 8, 384], strides = [1, 1, 1]} : vector<7x8x384xf32> to vector<1x8x384xf32>
    %204 = vector.shape_cast %203 : vector<1x8x384xf32> to vector<8x384xf32>
    %cst_30 = arith.constant dense<0.000000e+00> : vector<8x384xf32>
    %205 = tpu.matmul %202, %7, %cst_30 {dimension_numbers = #tpu.dot_dimension_numbers<[1], [0], [0], [1], [0, 0, 1, 1], [], []>} : vector<8x128xf32>, vector<128x384xf32>, vector<8x384xf32> -> vector<8x384xf32>
    %206 = vector.extract_strided_slice %204 {offsets = [0, 0], sizes = [8, 128], strides = [1, 1]} : vector<8x384xf32> to vector<8x128xf32>
    %207 = vector.extract_strided_slice %205 {offsets = [0, 0], sizes = [8, 128], strides = [1, 1]} : vector<8x384xf32> to vector<8x128xf32>
    %208 = arith.addf %206, %207 : vector<8x128xf32>
    %209 = arith.negf %208 : vector<8x128xf32>
    %210 = math.exp %209 : vector<8x128xf32>
    %cst_31 = arith.constant 1.000000e+00 : f32
    %211 = vector.broadcast %cst_31 : f32 to vector<8x128xf32>
    %212 = arith.addf %211, %210 : vector<8x128xf32>
    %213 = arith.divf %211, %212 : vector<8x128xf32>
    %214 = vector.extract_strided_slice %204 {offsets = [0, 128], sizes = [8, 128], strides = [1, 1]} : vector<8x384xf32> to vector<8x128xf32>
    %215 = vector.extract_strided_slice %205 {offsets = [0, 128], sizes = [8, 128], strides = [1, 1]} : vector<8x384xf32> to vector<8x128xf32>
    %216 = arith.addf %214, %215 : vector<8x128xf32>
    %217 = arith.negf %216 : vector<8x128xf32>
    %218 = math.exp %217 : vector<8x128xf32>
    %cst_32 = arith.constant 1.000000e+00 : f32
    %219 = vector.broadcast %cst_32 : f32 to vector<8x128xf32>
    %220 = arith.addf %219, %218 : vector<8x128xf32>
    %221 = arith.divf %219, %220 : vector<8x128xf32>
    %222 = vector.extract_strided_slice %204 {offsets = [0, 256], sizes = [8, 128], strides = [1, 1]} : vector<8x384xf32> to vector<8x128xf32>
    %223 = vector.extract_strided_slice %205 {offsets = [0, 256], sizes = [8, 128], strides = [1, 1]} : vector<8x384xf32> to vector<8x128xf32>
    %224 = vector.broadcast %8 : vector<1x128xf32> to vector<8x128xf32>
    %225 = arith.addf %223, %224 : vector<8x128xf32>
    %226 = arith.mulf %213, %225 : vector<8x128xf32>
    %227 = arith.addf %222, %226 : vector<8x128xf32>
    %228 = math.tanh %227 : vector<8x128xf32>
    %229 = arith.subf %202, %228 : vector<8x128xf32>
    %230 = arith.mulf %221, %229 : vector<8x128xf32>
    %231 = arith.addf %228, %230 : vector<8x128xf32>
    %c6_i32 = arith.constant 6 : i32
    %232 = vector.broadcast %c6_i32 : i32 to vector<8x128xi32>
    %233 = arith.cmpi sgt, %9, %232 : vector<8x128xi32>
    %234 = arith.select %233, %231, %202 : vector<8x128xi1>, vector<8x128xf32>
    %c0_33 = arith.constant 0 : index
    %c0_34 = arith.constant 0 : index
    %235 = vector.load %arg6[%c0_33, %c0_34] : memref<128x32xf32, #tpu.memory_space<vmem>>, vector<128x32xf32>
    %cst_35 = arith.constant dense<0.000000e+00> : vector<8x32xf32>
    %236 = tpu.matmul %234, %235, %cst_35 {dimension_numbers = #tpu.dot_dimension_numbers<[1], [0], [0], [1], [0, 0, 1, 1], [], []>} : vector<8x128xf32>, vector<128x32xf32>, vector<8x32xf32> -> vector<8x32xf32>
    %c0_36 = arith.constant 0 : index
    %c0_37 = arith.constant 0 : index
    %237 = vector.load %arg7[%c0_36, %c0_37] : memref<1x32xf32, #tpu.memory_space<vmem>>, vector<1x32xf32>
    %238 = vector.broadcast %237 : vector<1x32xf32> to vector<8x32xf32>
    %239 = arith.addf %236, %238 : vector<8x32xf32>
    %cst_38 = arith.constant 0.000000e+00 : f32
    %240 = vector.broadcast %cst_38 : f32 to vector<8x32xf32>
    %241 = arith.maximumf %239, %240 : vector<8x32xf32>
    %c0_39 = arith.constant 0 : index
    %c0_40 = arith.constant 0 : index
    %242 = vector.load %arg8[%c0_39, %c0_40] : memref<1x32xf32, #tpu.memory_space<vmem>>, vector<1x32xf32>
    %cst_41 = arith.constant dense<0.000000e+00> : vector<1x8xf32>
    %243 = tpu.matmul %242, %241, %cst_41 {dimension_numbers = #tpu.dot_dimension_numbers<[1], [1], [0], [0], [0, 0, 1, 0], [], []>} : vector<1x32xf32>, vector<8x32xf32>, vector<1x8xf32> -> vector<1x8xf32>
    %c0_42 = arith.constant 0 : index
    %c0_43 = arith.constant 0 : index
    %244 = vector.load %arg9[%c0_42, %c0_43] : memref<1x1xf32, #tpu.memory_space<vmem>>, vector<1x1xf32>
    %245 = vector.broadcast %244 : vector<1x1xf32> to vector<1x8xf32>
    %246 = arith.addf %243, %245 : vector<1x8xf32>
    %cst_44 = arith.constant 0.000000e+00 : f32
    %247 = vector.broadcast %cst_44 : f32 to vector<1x120xf32>
    %248 = tpu.concatenate %246, %247 in 1 : vector<1x8xf32>, vector<1x120xf32> -> vector<1x128xf32>
    %c0_45 = arith.constant 0 : index
    %c0_46 = arith.constant 0 : index
    %249 = vector.load %arg10[%c0_45, %c0_46] : memref<1x128xf32, #tpu.memory_space<vmem>>, vector<1x128xf32>
    tpu.vector_store %arg10[%c0_45, %c0_46], %248 {strides = array<i32>} : memref<1x128xf32, #tpu.memory_space<vmem>>, vector<1x128xf32>,
    return
  }
}

</mosaic_0001>

<llo_original>
// kernel: _drrn_forward_core.1
$region0: #{_drrn_forward_core.1}
  #allocation0 [shape = 'u32[]', space=smem, size = 0x4, offset = 0x4, fixed_abs, tag = 'smem constant byte address 0x4 - core index']
  #allocation1 [shape = 'u32[144,128]{1,0:T(1,128)}', space=vmem, size = 0x12000, scoped, tag = 'internal scratch']
  #allocation2 [shape = 'f32[1,1]{1,0:T(1,128)S(1)}', space=vmem, size = 0x200, scoped, tag = 'scoped memory for _drrn_forward_core.1']
  %s0 = inlined_call_operand.vmem [shape: f32[56,128], index: 0, kind: input, shape index: {}]
  %s1 = inlined_call_operand.vmem [shape: s32[8,128], index: 1, kind: input, shape index: {}]
  %s2 = inlined_call_operand.vmem [shape: f32[128,384], index: 2, kind: input, shape index: {}]
  %s3 = inlined_call_operand.vmem [shape: f32[128,384], index: 3, kind: input, shape index: {}]
  %s4 = inlined_call_operand.vmem [shape: f32[1,384], index: 4, kind: input, shape index: {}]
  %s5 = inlined_call_operand.vmem [shape: f32[1,128], index: 5, kind: input, shape index: {}]
  %s6 = inlined_call_operand.vmem [shape: f32[128,32], index: 6, kind: input, shape index: {}]
  %s7 = inlined_call_operand.vmem [shape: f32[1,32], index: 7, kind: input, shape index: {}]
  %s8 = inlined_call_operand.vmem [shape: f32[1,32], index: 8, kind: input, shape index: {}]
  %s9 = inlined_call_operand.<no memory space> [shape: f32[1,1], index: 9, kind: input, shape index: {}]
  %s10 = inlined_call_operand.vmem [shape: f32[1,128], index: 10, kind: output, shape index: {}]
  %s11 = sld [smem:[#allocation0]]
  $region50: #{_drrn_forward_core.1} parent=0
    _
  %s13 = ssub.s32 1, %s11
  %s14 = scalar_select 0, %s13, %s11
  %v15 = vstv %s9
  %16 = vst [vmem:[#allocation2] sm:$0x1] %v15
  // Predicated region
  $region2: #{_drrn_forward_core.1} parent=0 // pred_check
    _
  $region3: #{_drrn_forward_core.1} parent=0 // pred_check_branch
    %18 = sbr.rel (0) target = $region5
  $region4: #{_drrn_forward_core.1} parent=0 // pred_region
    _
  $region5: #{_drrn_forward_core.1} parent=0 // pred_fallthru
    _
  // Predicated region
  $region6: #{_drrn_forward_core.1} parent=0 // pred_check
    _
  $region7: #{_drrn_forward_core.1} parent=0 // pred_check_branch
    %20 = sbr.rel (0) target = $region9
  $region8: #{_drrn_forward_core.1} parent=0 // pred_region
    _
  $region9: #{_drrn_forward_core.1} parent=0 // pred_fallthru
    _
  // Predicated region
  $region10: #{_drrn_forward_core.1} parent=0 // pred_check
    _
  $region11: #{_drrn_forward_core.1} parent=0 // pred_check_branch
    %22 = sbr.rel (0) target = $region13
  $region12: #{_drrn_forward_core.1} parent=0 // pred_region
    _
  $region13: #{_drrn_forward_core.1} parent=0 // pred_fallthru
    _
  // Predicated region
  $region14: #{_drrn_forward_core.1} parent=0 // pred_check
    _
  $region15: #{_drrn_forward_core.1} parent=0 // pred_check_branch
    %24 = sbr.rel (0) target = $region17
  $region16: #{_drrn_forward_core.1} parent=0 // pred_region
    _
  $region17: #{_drrn_forward_core.1} parent=0 // pred_fallthru
    _
  // Predicated region
  $region18: #{_drrn_forward_core.1} parent=0 // pred_check
    _
  $region19: #{_drrn_forward_core.1} parent=0 // pred_check_branch
    %26 = sbr.rel (0) target = $region21
  $region20: #{_drrn_forward_core.1} parent=0 // pred_region
    _
  $region21: #{_drrn_forward_core.1} parent=0 // pred_fallthru
    _
  // Predicated region
  $region22: #{_drrn_forward_core.1} parent=0 // pred_check
    _
  $region23: #{_drrn_forward_core.1} parent=0 // pred_check_branch
    %28 = sbr.rel (0) target = $region25
  $region24: #{_drrn_forward_core.1} parent=0 // pred_region
    _
  $region25: #{_drrn_forward_core.1} parent=0 // pred_fallthru
    _
  // Predicated region
  $region26: #{_drrn_forward_core.1} parent=0 // pred_check
    _
  $region27: #{_drrn_forward_core.1} parent=0 // pred_check_branch
    %30 = sbr.rel (0) target = $region29
  $region28: #{_drrn_forward_core.1} parent=0 // pred_region
    _
  $region29: #{_drrn_forward_core.1} parent=0 // pred_fallthru
    _
  // Predicated region
  $region30: #{_drrn_forward_core.1} parent=0 // pred_check
    _
  $region31: #{_drrn_forward_core.1} parent=0 // pred_check_branch
    %32 = sbr.rel (0) target = $region33
  $region32: #{_drrn_forward_core.1} parent=0 // pred_region
    _
  $region33: #{_drrn_forward_core.1} parent=0 // pred_fallthru
    _
  // Predicated region
  $region34: #{_drrn_forward_core.1} parent=0 // pred_check
    _
  $region35: #{_drrn_forward_core.1} parent=0 // pred_check_branch
    %34 = sbr.rel (0) target = $region37
  $region36: #{_drrn_forward_core.1} parent=0 // pred_region
    _
  $region37: #{_drrn_forward_core.1} parent=0 // pred_fallthru
    _
  // Predicated region
  $region38: #{_drrn_forward_core.1} parent=0 // pred_check
    _
  $region39: #{_drrn_forward_core.1} parent=0 // pred_check_branch
    %36 = sbr.rel (0) target = $region41
  $region40: #{_drrn_forward_core.1} parent=0 // pred_region
    _
  $region41: #{_drrn_forward_core.1} parent=0 // pred_fallthru
    _
  %v37 = vld [vmem:[%s0] sm:$0xff]
  %v38 = vld [vmem:[%s0 + $0x8] sm:$0xff]
  %v39 = vld [vmem:[%s0 + $0x10] sm:$0xff]
  %v40 = vld [vmem:[%s0 + $0x18] sm:$0xff]
  %v41 = vld [vmem:[%s0 + $0x20] sm:$0xff]
  %v42 = vld [vmem:[%s0 + $0x28] sm:$0xff]
  %v43 = vld [vmem:[%s0 + $0x30] sm:$0xff]
  %v44 = vld [vmem:[%s2] sm:$0xff]
  %v45 = vld [vmem:[%s2 + $0x8] sm:$0xff]
  %v46 = vld [vmem:[%s2 + $0x10] sm:$0xff]
  %v47 = vld [vmem:[%s2 + $0x18] sm:$0xff]
  %v48 = vld [vmem:[%s2 + $0x20] sm:$0xff]
  %v49 = vld [vmem:[%s2 + $0x28] sm:$0xff]
  %v50 = vld [vmem:[%s2 + $0x30] sm:$0xff]
  %v51 = vld [vmem:[%s2 + $0x38] sm:$0xff]
  %v52 = vld [vmem:[%s2 + $0x40] sm:$0xff]
  %v53 = vld [vmem:[%s2 + $0x48] sm:$0xff]
  %v54 = vld [vmem:[%s2 + $0x50] sm:$0xff]
  %v55 = vld [vmem:[%s2 + $0x58] sm:$0xff]
  %v56 = vld [vmem:[%s2 + $0x60] sm:$0xff]
  %v57 = vld [vmem:[%s2 + $0x68] sm:$0xff]
  %v58 = vld [vmem:[%s2 + $0x70] sm:$0xff]
  %v59 = vld [vmem:[%s2 + $0x78] sm:$0xff]
  %v60 = vld [vmem:[%s2 + $0x80] sm:$0xff]
  %v61 = vld [vmem:[%s2 + $0x88] sm:$0xff]
  %v62 = vld [vmem:[%s2 + $0x90] sm:$0xff]
  %v63 = vld [vmem:[%s2 + $0x98] sm:$0xff]
  %v64 = vld [vmem:[%s2 + $0xa0] sm:$0xff]
  %v65 = vld [vmem:[%s2 + $0xa8] sm:$0xff]
  %v66 = vld [vmem:[%s2 + $0xb0] sm:$0xff]
  %v67 = vld [vmem:[%s2 + $0xb8] sm:$0xff]
  %v68 = vld [vmem:[%s2 + $0xc0] sm:$0xff]
  %v69 = vld [vmem:[%s2 + $0xc8] sm:$0xff]
  %v70 = vld [vmem:[%s2 + $0xd0] sm:$0xff]
  %v71 = vld [vmem:[%s2 + $0xd8] sm:$0xff]
  %v72 = vld [vmem:[%s2 + $0xe0] sm:$0xff]
  %v73 = vld [vmem:[%s2 + $0xe8] sm:$0xff]
  %v74 = vld [vmem:[%s2 + $0xf0] sm:$0xff]
  %v75 = vld [vmem:[%s2 + $0xf8] sm:$0xff]
  %v76 = vld [vmem:[%s2 + $0x100] sm:$0xff]
  %v77 = vld [vmem:[%s2 + $0x108] sm:$0xff]
  %v78 = vld [vmem:[%s2 + $0x110] sm:$0xff]
  %v79 = vld [vmem:[%s2 + $0x118] sm:$0xff]
  %v80 = vld [vmem:[%s2 + $0x120] sm:$0xff]
  %v81 = vld [vmem:[%s2 + $0x128] sm:$0xff]
  %v82 = vld [vmem:[%s2 + $0x130] sm:$0xff]
  %v83 = vld [vmem:[%s2 + $0x138] sm:$0xff]
  %v84 = vld [vmem:[%s2 + $0x140] sm:$0xff]
  %v85 = vld [vmem:[%s2 + $0x148] sm:$0xff]
  %v86 = vld [vmem:[%s2 + $0x150] sm:$0xff]
  %v87 = vld [vmem:[%s2 + $0x158] sm:$0xff]
  %v88 = vld [vmem:[%s2 + $0x160] sm:$0xff]
  %v89 = vld [vmem:[%s2 + $0x168] sm:$0xff]
  %v90 = vld [vmem:[%s2 + $0x170] sm:$0xff]
  %v91 = vld [vmem:[%s2 + $0x178] sm:$0xff]
  %v92 = vld [vmem:[%s4] sm:$0x7]
  %v94 = vlaneseq
  %v95 = vshrl.u32 %v94, 7
  %v96 = vsub.s32 0, %v95
  %v97 = vrot.slane %v92, %v96
  %v98 = vlaneseq
  %v99 = vshrl.u32 %v98, 7
  %v100 = vsub.s32 1, %v99
  %v101 = vrot.slane %v92, %v100
  %v102 = vlaneseq
  %v103 = vshrl.u32 %v102, 7
  %v104 = vsub.s32 2, %v103
  %v105 = vrot.slane %v92, %v104
  %109 = vmatprep.subr.mxu0 %v45
  %110 = vmatpush1.msra.mxu0 %v44
  %111 = vmatprep.subr.mxu0 %v48
  %112 = vmatpush1.msra.mxu0 %v47
  %113 = vmatprep.subr.mxu0 %v51
  %114 = vmatpush1.msra.mxu0 %v50
  %115 = vmatprep.subr.mxu0 %v54
  %116 = vmatpush1.msra.mxu0 %v53
  %117 = vmatprep.subr.mxu0 %v57
  %118 = vmatpush1.msra.mxu0 %v56
  %119 = vmatprep.subr.mxu0 %v60
  %120 = vmatpush1.msra.mxu0 %v59
  %121 = vmatprep.subr.mxu0 %v63
  %122 = vmatpush1.msra.mxu0 %v62
  %123 = vmatprep.subr.mxu0 %v66
  %124 = vmatpush1.msra.mxu0 %v65
  %125 = vmatprep.subr.mxu0 %v69
  %126 = vmatpush1.msra.mxu0 %v68
  %127 = vmatprep.subr.mxu0 %v72
  %128 = vmatpush1.msra.mxu0 %v71
  %129 = vmatprep.subr.mxu0 %v75
  %130 = vmatpush1.msra.mxu0 %v74
  %131 = vmatprep.subr.mxu0 %v78
  %132 = vmatpush1.msra.mxu0 %v77
  %133 = vmatprep.subr.mxu0 %v81
  %134 = vmatpush1.msra.mxu0 %v80
  %135 = vmatprep.subr.mxu0 %v84
  %136 = vmatpush1.msra.mxu0 %v83
  %137 = vmatprep.subr.mxu0 %v87
  %138 = vmatpush1.msra.mxu0 %v86
  %139 = vmatprep.subr.mxu0 %v90
  %140 = vmatpush1.msra.mxu0 %v89
  %141 = vmatprep.subr.mxu0 0.0
  %142 = vmatpush1.msra.mxu0 0.0
  %143 = vmatprep.subr.mxu0 0.0
  %144 = vmatpush1.msra.mxu0 0.0
  %145 = vmatprep.subr.mxu0 0.0
  %146 = vmatpush1.msra.mxu0 0.0
  %147 = vmatprep.subr.mxu0 0.0
  %148 = vmatpush1.msra.mxu0 0.0
  %149 = vmatprep.subr.mxu0 0.0
  %150 = vmatpush1.msra.mxu0 0.0
  %151 = vmatprep.subr.mxu0 0.0
  %152 = vmatpush1.msra.mxu0 0.0
  %153 = vmatprep.subr.mxu0 0.0
  %154 = vmatpush1.msra.mxu0 0.0
  %155 = vmatprep.subr.mxu0 0.0
  %156 = vmatpush1.msra.mxu0 0.0
  %157 = vmatprep.subr.mxu0 0.0
  %158 = vmatpush1.msra.mxu0 0.0
  %159 = vmatprep.subr.mxu0 0.0
  %160 = vmatpush1.msra.mxu0 0.0
  %161 = vmatprep.subr.mxu0 0.0
  %162 = vmatpush1.msra.mxu0 0.0
  %163 = vmatprep.subr.mxu0 0.0
  %164 = vmatpush1.msra.mxu0 0.0
  %165 = vmatprep.subr.mxu0 0.0
  %166 = vmatpush1.msra.mxu0 0.0
  %167 = vmatprep.subr.mxu0 0.0
  %168 = vmatpush1.msra.mxu0 0.0
  %169 = vmatprep.subr.mxu0 0.0
  %170 = vmatpush1.msra.mxu0 0.0
  %171 = vmatprep.subr.mxu0 0.0
  %172 = vmatpush1.msra.mxu0 0.0
  %173 = vmatprep.mubr.f32.mxu0 0.0
  %174 = vmatmul.mubr.f32.gmra.mrb[0].mxu0 %v37
  %v175 = vpop.f32.mrb[0].mxu0
  %v176 = vadd.f32 %v97, %v175
  %v177 = vpop.f32.mrb[0].mxu0
  %v178 = vadd.f32 %v101, %v177
  %179 = vmatprep.mubr.f32.mxu0 0.0
  %180 = vmatmul.mubr.f32.gmra.mrb[0].mxu0 %v38
  %v181 = vpop.f32.mrb[0].mxu0
  %v182 = vadd.f32 %v97, %v181
  %v183 = vpop.f32.mrb[0].mxu0
  %v184 = vadd.f32 %v101, %v183
  %185 = vmatprep.mubr.f32.mxu0 0.0
  %186 = vmatmul.mubr.f32.gmra.mrb[0].mxu0 %v39
  %v187 = vpop.f32.mrb[0].mxu0
  %v188 = vadd.f32 %v97, %v187
  %v189 = vpop.f32.mrb[0].mxu0
  %v190 = vadd.f32 %v101, %v189
  %191 = vmatprep.mubr.f32.mxu0 0.0
  %192 = vmatmul.mubr.f32.gmra.mrb[0].mxu0 %v40
  %v193 = vpop.f32.mrb[0].mxu0
  %v194 = vadd.f32 %v97, %v193
  %v195 = vpop.f32.mrb[0].mxu0
  %v196 = vadd.f32 %v101, %v195
  %197 = vmatprep.mubr.f32.mxu0 0.0
  %198 = vmatmul.mubr.f32.gmra.mrb[0].mxu0 %v41
  %v199 = vpop.f32.mrb[0].mxu0
  %v200 = vadd.f32 %v97, %v199
  %v201 = vpop.f32.mrb[0].mxu0
  %v202 = vadd.f32 %v101, %v201
  %203 = vmatprep.mubr.f32.mxu0 0.0
  %204 = vmatmul.mubr.f32.gmra.mrb[0].mxu0 %v42
  %v205 = vpop.f32.mrb[0].mxu0
  %v206 = vadd.f32 %v97, %v205
  %v207 = vpop.f32.mrb[0].mxu0
  %v208 = vadd.f32 %v101, %v207
  %209 = vmatprep.mubr.f32.mxu0 0.0
  %210 = vmatmul.mubr.f32.gmra.mrb[0].mxu0 %v43
  %v211 = vpop.f32.mrb[0].mxu0
  %v212 = vadd.f32 %v97, %v211
  %v213 = vpop.f32.mrb[0].mxu0
  %v214 = vadd.f32 %v101, %v213
  %215 = vdwg.mxu0
  %216 = vmatprep.subr.mxu0 0.0
  %217 = vmatpush1.msra.mxu0 %v46
  %218 = vmatprep.subr.mxu0 0.0
  %219 = vmatpush1.msra.mxu0 %v49
  %220 = vmatprep.subr.mxu0 0.0
  %221 = vmatpush1.msra.mxu0 %v52
  %222 = vmatprep.subr.mxu0 0.0
  %223 = vmatpush1.msra.mxu0 %v55
  %224 = vmatprep.subr.mxu0 0.0
  %225 = vmatpush1.msra.mxu0 %v58
  %226 = vmatprep.subr.mxu0 0.0
  %227 = vmatpush1.msra.mxu0 %v61
  %228 = vmatprep.subr.mxu0 0.0
  %229 = vmatpush1.msra.mxu0 %v64
  %230 = vmatprep.subr.mxu0 0.0
  %231 = vmatpush1.msra.mxu0 %v67
  %232 = vmatprep.subr.mxu0 0.0
  %233 = vmatpush1.msra.mxu0 %v70
  %234 = vmatprep.subr.mxu0 0.0
  %235 = vmatpush1.msra.mxu0 %v73
  %236 = vmatprep.subr.mxu0 0.0
  %237 = vmatpush1.msra.mxu0 %v76
  %238 = vmatprep.subr.mxu0 0.0
  %239 = vmatpush1.msra.mxu0 %v79
  %240 = vmatprep.subr.mxu0 0.0
  %241 = vmatpush1.msra.mxu0 %v82
  %242 = vmatprep.subr.mxu0 0.0
  %243 = vmatpush1.msra.mxu0 %v85
  %244 = vmatprep.subr.mxu0 0.0
  %245 = vmatpush1.msra.mxu0 %v88
  %246 = vmatprep.subr.mxu0 0.0
  %247 = vmatpush1.msra.mxu0 %v91
  %248 = vmatprep.subr.mxu0 0.0
  %249 = vmatpush1.msra.mxu0 0.0
  %250 = vmatprep.subr.mxu0 0.0
  %251 = vmatpush1.msra.mxu0 0.0
  %252 = vmatprep.subr.mxu0 0.0
  %253 = vmatpush1.msra.mxu0 0.0
  %254 = vmatprep.subr.mxu0 0.0
  %255 = vmatpush1.msra.mxu0 0.0
  %256 = vmatprep.subr.mxu0 0.0
  %257 = vmatpush1.msra.mxu0 0.0
  %258 = vmatprep.subr.mxu0 0.0
  %259 = vmatpush1.msra.mxu0 0.0
  %260 = vmatprep.subr.mxu0 0.0
  %261 = vmatpush1.msra.mxu0 0.0
  %262 = vmatprep.subr.mxu0 0.0
  %263 = vmatpush1.msra.mxu0 0.0
  %264 = vmatprep.subr.mxu0 0.0
  %265 = vmatpush1.msra.mxu0 0.0
  %266 = vmatprep.subr.mxu0 0.0
  %267 = vmatpush1.msra.mxu0 0.0
  %268 = vmatprep.subr.mxu0 0.0
  %269 = vmatpush1.msra.mxu0 0.0
  %270 = vmatprep.subr.mxu0 0.0
  %271 = vmatpush1.msra.mxu0 0.0
  %272 = vmatprep.subr.mxu0 0.0
  %273 = vmatpush1.msra.mxu0 0.0
  %274 = vmatprep.subr.mxu0 0.0
  %275 = vmatpush1.msra.mxu0 0.0
  %276 = vmatprep.subr.mxu0 0.0
  %277 = vmatpush1.msra.mxu0 0.0
  %278 = vmatprep.subr.mxu0 0.0
  %279 = vmatpush1.msra.mxu0 0.0
  %280 = vmatprep.mubr.f32.mxu0 0.0
  %281 = vmatmul.mubr.f32.gmra.mrb[0].mxu0 %v37
  %v282 = vpop.f32.mrb[0].mxu0
  %v283 = vadd.f32 %v105, %v282
  %v284 = vpop.f32.mrb[0].mxu0
  %285 = vmatprep.mubr.f32.mxu0 0.0
  %286 = vmatmul.mubr.f32.gmra.mrb[0].mxu0 %v38
  %v287 = vpop.f32.mrb[0].mxu0
  %v288 = vadd.f32 %v105, %v287
  %v289 = vpop.f32.mrb[0].mxu0
  %290 = vmatprep.mubr.f32.mxu0 0.0
  %291 = vmatmul.mubr.f32.gmra.mrb[0].mxu0 %v39
  %v292 = vpop.f32.mrb[0].mxu0
  %v293 = vadd.f32 %v105, %v292
  %v294 = vpop.f32.mrb[0].mxu0
  %295 = vmatprep.mubr.f32.mxu0 0.0
  %296 = vmatmul.mubr.f32.gmra.mrb[0].mxu0 %v40
  %v297 = vpop.f32.mrb[0].mxu0
  %v298 = vadd.f32 %v105, %v297
  %v299 = vpop.f32.mrb[0].mxu0
  %300 = vmatprep.mubr.f32.mxu0 0.0
  %301 = vmatmul.mubr.f32.gmra.mrb[0].mxu0 %v41
  %v302 = vpop.f32.mrb[0].mxu0
  %v303 = vadd.f32 %v105, %v302
  %v304 = vpop.f32.mrb[0].mxu0
  %305 = vmatprep.mubr.f32.mxu0 0.0
  %306 = vmatmul.mubr.f32.gmra.mrb[0].mxu0 %v42
  %v307 = vpop.f32.mrb[0].mxu0
  %v308 = vadd.f32 %v105, %v307
  %v309 = vpop.f32.mrb[0].mxu0
  %310 = vmatprep.mubr.f32.mxu0 0.0
  %311 = vmatmul.mubr.f32.gmra.mrb[0].mxu0 %v43
  %v312 = vpop.f32.mrb[0].mxu0
  %v313 = vadd.f32 %v105, %v312
  %v314 = vpop.f32.mrb[0].mxu0
  %315 = vdwg.mxu0
  %v316 = vld [vmem:[%s3] sm:$0xff]
  %v317 = vld [vmem:[%s3 + $0x8] sm:$0xff]
  %v318 = vld [vmem:[%s3 + $0x10] sm:$0xff]
  %v319 = vld [vmem:[%s3 + $0x18] sm:$0xff]
  %v320 = vld [vmem:[%s3 + $0x20] sm:$0xff]
  %v321 = vld [vmem:[%s3 + $0x28] sm:$0xff]
  %v322 = vld [vmem:[%s3 + $0x30] sm:$0xff]
  %v323 = vld [vmem:[%s3 + $0x38] sm:$0xff]
  %v324 = vld [vmem:[%s3 + $0x40] sm:$0xff]
  %v325 = vld [vmem:[%s3 + $0x48] sm:$0xff]
  %v326 = vld [vmem:[%s3 + $0x50] sm:$0xff]
  %v327 = vld [vmem:[%s3 + $0x58] sm:$0xff]
  %v328 = vld [vmem:[%s3 + $0x60] sm:$0xff]
  %v329 = vld [vmem:[%s3 + $0x68] sm:$0xff]
  %v330 = vld [vmem:[%s3 + $0x70] sm:$0xff]
  %v331 = vld [vmem:[%s3 + $0x78] sm:$0xff]
  %v332 = vld [vmem:[%s3 + $0x80] sm:$0xff]
  %v333 = vld [vmem:[%s3 + $0x88] sm:$0xff]
  %v334 = vld [vmem:[%s3 + $0x90] sm:$0xff]
  %v335 = vld [vmem:[%s3 + $0x98] sm:$0xff]
  %v336 = vld [vmem:[%s3 + $0xa0] sm:$0xff]
  %v337 = vld [vmem:[%s3 + $0xa8] sm:$0xff]
  %v338 = vld [vmem:[%s3 + $0xb0] sm:$0xff]
  %v339 = vld [vmem:[%s3 + $0xb8] sm:$0xff]
  %v340 = vld [vmem:[%s3 + $0xc0] sm:$0xff]
  %v341 = vld [vmem:[%s3 + $0xc8] sm:$0xff]
  %v342 = vld [vmem:[%s3 + $0xd0] sm:$0xff]
  %v343 = vld [vmem:[%s3 + $0xd8] sm:$0xff]
  %v344 = vld [vmem:[%s3 + $0xe0] sm:$0xff]
  %v345 = vld [vmem:[%s3 + $0xe8] sm:$0xff]
  %v346 = vld [vmem:[%s3 + $0xf0] sm:$0xff]
  %v347 = vld [vmem:[%s3 + $0xf8] sm:$0xff]
  %v348 = vld [vmem:[%s3 + $0x100] sm:$0xff]
  %v349 = vld [vmem:[%s3 + $0x108] sm:$0xff]
  %v350 = vld [vmem:[%s3 + $0x110] sm:$0xff]
  %v351 = vld [vmem:[%s3 + $0x118] sm:$0xff]
  %v352 = vld [vmem:[%s3 + $0x120] sm:$0xff]
  %v353 = vld [vmem:[%s3 + $0x128] sm:$0xff]
  %v354 = vld [vmem:[%s3 + $0x130] sm:$0xff]
  %v355 = vld [vmem:[%s3 + $0x138] sm:$0xff]
  %v356 = vld [vmem:[%s3 + $0x140] sm:$0xff]
  %v357 = vld [vmem:[%s3 + $0x148] sm:$0xff]
  %v358 = vld [vmem:[%s3 + $0x150] sm:$0xff]
  %v359 = vld [vmem:[%s3 + $0x158] sm:$0xff]
  %v360 = vld [vmem:[%s3 + $0x160] sm:$0xff]
  %v361 = vld [vmem:[%s3 + $0x168] sm:$0xff]
  %v362 = vld [vmem:[%s3 + $0x170] sm:$0xff]
  %v363 = vld [vmem:[%s3 + $0x178] sm:$0xff]
  %v364 = vld [vmem:[%s5] sm:$0x1]
  %v365 = vld [vmem:[%s1] sm:$0xff]
  %366 = vmatprep.subr.mxu0 %v317
  %367 = vmatpush1.msra.mxu0 %v316
  %368 = vmatprep.subr.mxu0 %v320
  %369 = vmatpush1.msra.mxu0 %v319
  %370 = vmatprep.subr.mxu0 %v323
  %371 = vmatpush1.msra.mxu0 %v322
  %372 = vmatprep.subr.mxu0 %v326
  %373 = vmatpush1.msra.mxu0 %v325
  %374 = vmatprep.subr.mxu0 %v329
  %375 = vmatpush1.msra.mxu0 %v328
  %376 = vmatprep.subr.mxu0 %v332
  %377 = vmatpush1.msra.mxu0 %v331
  %378 = vmatprep.subr.mxu0 %v335
  %379 = vmatpush1.msra.mxu0 %v334
  %380 = vmatprep.subr.mxu0 %v338
  %381 = vmatpush1.msra.mxu0 %v337
  %382 = vmatprep.subr.mxu0 %v341
  %383 = vmatpush1.msra.mxu0 %v340
  %384 = vmatprep.subr.mxu0 %v344
  %385 = vmatpush1.msra.mxu0 %v343
  %386 = vmatprep.subr.mxu0 %v347
  %387 = vmatpush1.msra.mxu0 %v346
  %388 = vmatprep.subr.mxu0 %v350
  %389 = vmatpush1.msra.mxu0 %v349
  %390 = vmatprep.subr.mxu0 %v353
  %391 = vmatpush1.msra.mxu0 %v352
  %392 = vmatprep.subr.mxu0 %v356
  %393 = vmatpush1.msra.mxu0 %v355
  %394 = vmatprep.subr.mxu0 %v359
  %395 = vmatpush1.msra.mxu0 %v358
  %396 = vmatprep.subr.mxu0 %v362
  %397 = vmatpush1.msra.mxu0 %v361
  %398 = vmatprep.subr.mxu0 0.0
  %399 = vmatpush1.msra.mxu0 0.0
  %400 = vmatprep.subr.mxu0 0.0
  %401 = vmatpush1.msra.mxu0 0.0
  %402 = vmatprep.subr.mxu0 0.0
  %403 = vmatpush1.msra.mxu0 0.0
  %404 = vmatprep.subr.mxu0 0.0
  %405 = vmatpush1.msra.mxu0 0.0
  %406 = vmatprep.subr.mxu0 0.0
  %407 = vmatpush1.msra.mxu0 0.0
  %408 = vmatprep.subr.mxu0 0.0
  %409 = vmatpush1.msra.mxu0 0.0
  %410 = vmatprep.subr.mxu0 0.0
  %411 = vmatpush1.msra.mxu0 0.0
  %412 = vmatprep.subr.mxu0 0.0
  %413 = vmatpush1.msra.mxu0 0.0
  %414 = vmatprep.subr.mxu0 0.0
  %415 = vmatpush1.msra.mxu0 0.0
  %416 = vmatprep.subr.mxu0 0.0
  %417 = vmatpush1.msra.mxu0 0.0
  %418 = vmatprep.subr.mxu0 0.0
  %419 = vmatpush1.msra.mxu0 0.0
  %420 = vmatprep.subr.mxu0 0.0
  %421 = vmatpush1.msra.mxu0 0.0
  %422 = vmatprep.subr.mxu0 0.0
  %423 = vmatpush1.msra.mxu0 0.0
  %424 = vmatprep.subr.mxu0 0.0
  %425 = vmatpush1.msra.mxu0 0.0
  %426 = vmatprep.subr.mxu0 0.0
  %427 = vmatpush1.msra.mxu0 0.0
  %428 = vmatprep.subr.mxu0 0.0
  %429 = vmatpush1.msra.mxu0 0.0
  %430 = vmatprep.mubr.f32.mxu0 0.0
  %431 = vmatmul.mubr.f32.gmra.mrb[0].mxu0 0.0
  %v432 = vpop.f32.mrb[0].mxu0
  %v433 = vadd.f32 0.0, %v432
  %v434 = vpop.f32.mrb[0].mxu0
  %v435 = vadd.f32 0.0, %v434
  %436 = vdwg.mxu0
  %437 = vmatprep.subr.mxu0 0.0
  %438 = vmatpush1.msra.mxu0 %v318
  %439 = vmatprep.subr.mxu0 0.0
  %440 = vmatpush1.msra.mxu0 %v321
  %441 = vmatprep.subr.mxu0 0.0
  %442 = vmatpush1.msra.mxu0 %v324
  %443 = vmatprep.subr.mxu0 0.0
  %444 = vmatpush1.msra.mxu0 %v327
  %445 = vmatprep.subr.mxu0 0.0
  %446 = vmatpush1.msra.mxu0 %v330
  %447 = vmatprep.subr.mxu0 0.0
  %448 = vmatpush1.msra.mxu0 %v333
  %449 = vmatprep.subr.mxu0 0.0
  %450 = vmatpush1.msra.mxu0 %v336
  %451 = vmatprep.subr.mxu0 0.0
  %452 = vmatpush1.msra.mxu0 %v339
  %453 = vmatprep.subr.mxu0 0.0
  %454 = vmatpush1.msra.mxu0 %v342
  %455 = vmatprep.subr.mxu0 0.0
  %456 = vmatpush1.msra.mxu0 %v345
  %457 = vmatprep.subr.mxu0 0.0
  %458 = vmatpush1.msra.mxu0 %v348
  %459 = vmatprep.subr.mxu0 0.0
  %460 = vmatpush1.msra.mxu0 %v351
  %461 = vmatprep.subr.mxu0 0.0
  %462 = vmatpush1.msra.mxu0 %v354
  %463 = vmatprep.subr.mxu0 0.0
  %464 = vmatpush1.msra.mxu0 %v357
  %465 = vmatprep.subr.mxu0 0.0
  %466 = vmatpush1.msra.mxu0 %v360
  %467 = vmatprep.subr.mxu0 0.0
  %468 = vmatpush1.msra.mxu0 %v363
  %469 = vmatprep.subr.mxu0 0.0
  %470 = vmatpush1.msra.mxu0 0.0
  %471 = vmatprep.subr.mxu0 0.0
  %472 = vmatpush1.msra.mxu0 0.0
  %473 = vmatprep.subr.mxu0 0.0
  %474 = vmatpush1.msra.mxu0 0.0
  %475 = vmatprep.subr.mxu0 0.0
  %476 = vmatpush1.msra.mxu0 0.0
  %477 = vmatprep.subr.mxu0 0.0
  %478 = vmatpush1.msra.mxu0 0.0
  %479 = vmatprep.subr.mxu0 0.0
  %480 = vmatpush1.msra.mxu0 0.0
  %481 = vmatprep.subr.mxu0 0.0
  %482 = vmatpush1.msra.mxu0 0.0
  %483 = vmatprep.subr.mxu0 0.0
  %484 = vmatpush1.msra.mxu0 0.0
  %485 = vmatprep.subr.mxu0 0.0
  %486 = vmatpush1.msra.mxu0 0.0
  %487 = vmatprep.subr.mxu0 0.0
  %488 = vmatpush1.msra.mxu0 0.0
  %489 = vmatprep.subr.mxu0 0.0
  %490 = vmatpush1.msra.mxu0 0.0
  %491 = vmatprep.subr.mxu0 0.0
  %492 = vmatpush1.msra.mxu0 0.0
  %493 = vmatprep.subr.mxu0 0.0
  %494 = vmatpush1.msra.mxu0 0.0
  %495 = vmatprep.subr.mxu0 0.0
  %496 = vmatpush1.msra.mxu0 0.0
  %497 = vmatprep.subr.mxu0 0.0
  %498 = vmatpush1.msra.mxu0 0.0
  %499 = vmatprep.subr.mxu0 0.0
  %500 = vmatpush1.msra.mxu0 0.0
  %501 = vmatprep.mubr.f32.mxu0 0.0
  %502 = vmatmul.mubr.f32.gmra.mrb[0].mxu0 0.0
  %v503 = vpop.f32.mrb[0].mxu0
  %v504 = vadd.f32 0.0, %v503
  %v505 = vpop.f32.mrb[0].mxu0
  %506 = vdwg.mxu0
  %v507 = vadd.f32 %v176, %v433
  %v508 = vxor.u32 %v507, 2147483648
  %v509 = vmul.f32 %v508, 1.442695
  %v510 = vpow.pop %v509
  %v511 = vadd.f32 %v510, 1.0
  %v512 = vrcp.pop %v511
  %v513 = vmul.f32 1.0, %v512
  %v514 = vadd.f32 %v178, %v435
  %v515 = vxor.u32 %v514, 2147483648
  %v516 = vmul.f32 %v515, 1.442695
  %v517 = vpow.pop %v516
  %v518 = vadd.f32 %v517, 1.0
  %v519 = vrcp.pop %v518
  %v520 = vmul.f32 1.0, %v519
  %v522 = vlaneseq
  %v523 = vshrl.u32 %v522, 7
  %v524 = vsub.s32 0, %v523
  %v525 = vrot.slane %v364, %v524
  %v527 = vadd.f32 %v504, %v525
  %v528 = vmul.f32 %v513, %v527
  %v529 = vadd.f32 %v283, %v528
  %v530 = vtanh.pop %v529
  %v531 = vsub.f32 0.0, %v530
  %v532 = vmul.f32 %v520, %v531
  %v533 = vadd.f32 %v530, %v532
  %vm534 = vcmp.gt.s32.totalorder %v365, 0
  %v535 = vsel %vm534, %v533, 0.0
  %536 = vmatprep.subr.mxu0 %v317
  %537 = vmatpush1.msra.mxu0 %v316
  %538 = vmatprep.subr.mxu0 %v320
  %539 = vmatpush1.msra.mxu0 %v319
  %540 = vmatprep.subr.mxu0 %v323
  %541 = vmatpush1.msra.mxu0 %v322
  %542 = vmatprep.subr.mxu0 %v326
  %543 = vmatpush1.msra.mxu0 %v325
  %544 = vmatprep.subr.mxu0 %v329
  %545 = vmatpush1.msra.mxu0 %v328
  %546 = vmatprep.subr.mxu0 %v332
  %547 = vmatpush1.msra.mxu0 %v331
  %548 = vmatprep.subr.mxu0 %v335
  %549 = vmatpush1.msra.mxu0 %v334
  %550 = vmatprep.subr.mxu0 %v338
  %551 = vmatpush1.msra.mxu0 %v337
  %552 = vmatprep.subr.mxu0 %v341
  %553 = vmatpush1.msra.mxu0 %v340
  %554 = vmatprep.subr.mxu0 %v344
  %555 = vmatpush1.msra.mxu0 %v343
  %556 = vmatprep.subr.mxu0 %v347
  %557 = vmatpush1.msra.mxu0 %v346
  %558 = vmatprep.subr.mxu0 %v350
  %559 = vmatpush1.msra.mxu0 %v349
  %560 = vmatprep.subr.mxu0 %v353
  %561 = vmatpush1.msra.mxu0 %v352
  %562 = vmatprep.subr.mxu0 %v356
  %563 = vmatpush1.msra.mxu0 %v355
  %564 = vmatprep.subr.mxu0 %v359
  %565 = vmatpush1.msra.mxu0 %v358
  %566 = vmatprep.subr.mxu0 %v362
  %567 = vmatpush1.msra.mxu0 %v361
  %568 = vmatprep.subr.mxu0 0.0
  %569 = vmatpush1.msra.mxu0 0.0
  %570 = vmatprep.subr.mxu0 0.0
  %571 = vmatpush1.msra.mxu0 0.0
  %572 = vmatprep.subr.mxu0 0.0
  %573 = vmatpush1.msra.mxu0 0.0
  %574 = vmatprep.subr.mxu0 0.0
  %575 = vmatpush1.msra.mxu0 0.0
  %576 = vmatprep.subr.mxu0 0.0
  %577 = vmatpush1.msra.mxu0 0.0
  %578 = vmatprep.subr.mxu0 0.0
  %579 = vmatpush1.msra.mxu0 0.0
  %580 = vmatprep.subr.mxu0 0.0
  %581 = vmatpush1.msra.mxu0 0.0
  %582 = vmatprep.subr.mxu0 0.0
  %583 = vmatpush1.msra.mxu0 0.0
  %584 = vmatprep.subr.mxu0 0.0
  %585 = vmatpush1.msra.mxu0 0.0
  %586 = vmatprep.subr.mxu0 0.0
  %587 = vmatpush1.msra.mxu0 0.0
  %588 = vmatprep.subr.mxu0 0.0
  %589 = vmatpush1.msra.mxu0 0.0
  %590 = vmatprep.subr.mxu0 0.0
  %591 = vmatpush1.msra.mxu0 0.0
  %592 = vmatprep.subr.mxu0 0.0
  %593 = vmatpush1.msra.mxu0 0.0
  %594 = vmatprep.subr.mxu0 0.0
  %595 = vmatpush1.msra.mxu0 0.0
  %596 = vmatprep.subr.mxu0 0.0
  %597 = vmatpush1.msra.mxu0 0.0
  %598 = vmatprep.subr.mxu0 0.0
  %599 = vmatpush1.msra.mxu0 0.0
  %600 = vmatprep.mubr.f32.mxu0 0.0
  %601 = vmatmul.mubr.f32.gmra.mrb[0].mxu0 %v535
  %v602 = vpop.f32.mrb[0].mxu0
  %v603 = vadd.f32 0.0, %v602
  %v604 = vpop.f32.mrb[0].mxu0
  %v605 = vadd.f32 0.0, %v604
  %606 = vdwg.mxu0
  %607 = vmatprep.subr.mxu0 0.0
  %608 = vmatpush1.msra.mxu0 %v318
  %609 = vmatprep.subr.mxu0 0.0
  %610 = vmatpush1.msra.mxu0 %v321
  %611 = vmatprep.subr.mxu0 0.0
  %612 = vmatpush1.msra.mxu0 %v324
  %613 = vmatprep.subr.mxu0 0.0
  %614 = vmatpush1.msra.mxu0 %v327
  %615 = vmatprep.subr.mxu0 0.0
  %616 = vmatpush1.msra.mxu0 %v330
  %617 = vmatprep.subr.mxu0 0.0
  %618 = vmatpush1.msra.mxu0 %v333
  %619 = vmatprep.subr.mxu0 0.0
  %620 = vmatpush1.msra.mxu0 %v336
  %621 = vmatprep.subr.mxu0 0.0
  %622 = vmatpush1.msra.mxu0 %v339
  %623 = vmatprep.subr.mxu0 0.0
  %624 = vmatpush1.msra.mxu0 %v342
  %625 = vmatprep.subr.mxu0 0.0
  %626 = vmatpush1.msra.mxu0 %v345
  %627 = vmatprep.subr.mxu0 0.0
  %628 = vmatpush1.msra.mxu0 %v348
  %629 = vmatprep.subr.mxu0 0.0
  %630 = vmatpush1.msra.mxu0 %v351
  %631 = vmatprep.subr.mxu0 0.0
  %632 = vmatpush1.msra.mxu0 %v354
  %633 = vmatprep.subr.mxu0 0.0
  %634 = vmatpush1.msra.mxu0 %v357
  %635 = vmatprep.subr.mxu0 0.0
  %636 = vmatpush1.msra.mxu0 %v360
  %637 = vmatprep.subr.mxu0 0.0
  %638 = vmatpush1.msra.mxu0 %v363
  %639 = vmatprep.subr.mxu0 0.0
  %640 = vmatpush1.msra.mxu0 0.0
  %641 = vmatprep.subr.mxu0 0.0
  %642 = vmatpush1.msra.mxu0 0.0
  %643 = vmatprep.subr.mxu0 0.0
  %644 = vmatpush1.msra.mxu0 0.0
  %645 = vmatprep.subr.mxu0 0.0
  %646 = vmatpush1.msra.mxu0 0.0
  %647 = vmatprep.subr.mxu0 0.0
  %648 = vmatpush1.msra.mxu0 0.0
  %649 = vmatprep.subr.mxu0 0.0
  %650 = vmatpush1.msra.mxu0 0.0
  %651 = vmatprep.subr.mxu0 0.0
  %652 = vmatpush1.msra.mxu0 0.0
  %653 = vmatprep.subr.mxu0 0.0
  %654 = vmatpush1.msra.mxu0 0.0
  %655 = vmatprep.subr.mxu0 0.0
  %656 = vmatpush1.msra.mxu0 0.0
  %657 = vmatprep.subr.mxu0 0.0
  %658 = vmatpush1.msra.mxu0 0.0
  %659 = vmatprep.subr.mxu0 0.0
  %660 = vmatpush1.msra.mxu0 0.0
  %661 = vmatprep.subr.mxu0 0.0
  %662 = vmatpush1.msra.mxu0 0.0
  %663 = vmatprep.subr.mxu0 0.0
  %664 = vmatpush1.msra.mxu0 0.0
  %665 = vmatprep.subr.mxu0 0.0
  %666 = vmatpush1.msra.mxu0 0.0
  %667 = vmatprep.subr.mxu0 0.0
  %668 = vmatpush1.msra.mxu0 0.0
  %669 = vmatprep.subr.mxu0 0.0
  %670 = vmatpush1.msra.mxu0 0.0
  %671 = vmatprep.mubr.f32.mxu0 0.0
  %672 = vmatmul.mubr.f32.gmra.mrb[0].mxu0 %v535
  %v673 = vpop.f32.mrb[0].mxu0
  %v674 = vadd.f32 0.0, %v673
  %v675 = vpop.f32.mrb[0].mxu0
  %676 = vdwg.mxu0
  %v677 = vadd.f32 %v182, %v603
  %v678 = vxor.u32 %v677, 2147483648
  %v679 = vmul.f32 %v678, 1.442695
  %v680 = vpow.pop %v679
  %v681 = vadd.f32 %v680, 1.0
  %v682 = vrcp.pop %v681
  %v683 = vmul.f32 1.0, %v682
  %v684 = vadd.f32 %v184, %v605
  %v685 = vxor.u32 %v684, 2147483648
  %v686 = vmul.f32 %v685, 1.442695
  %v687 = vpow.pop %v686
  %v688 = vadd.f32 %v687, 1.0
  %v689 = vrcp.pop %v688
  %v690 = vmul.f32 1.0, %v689
  %v691 = vadd.f32 %v674, %v525
  %v692 = vmul.f32 %v683, %v691
  %v693 = vadd.f32 %v288, %v692
  %v694 = vtanh.pop %v693
  %v695 = vsub.f32 %v535, %v694
  %v696 = vmul.f32 %v690, %v695
  %v697 = vadd.f32 %v694, %v696
  %vm698 = vcmp.gt.s32.totalorder %v365, 1
  %v699 = vsel %vm698, %v697, %v535
  %700 = vmatprep.subr.mxu0 %v317
  %701 = vmatpush1.msra.mxu0 %v316
  %702 = vmatprep.subr.mxu0 %v320
  %703 = vmatpush1.msra.mxu0 %v319
  %704 = vmatprep.subr.mxu0 %v323
  %705 = vmatpush1.msra.mxu0 %v322
  %706 = vmatprep.subr.mxu0 %v326
  %707 = vmatpush1.msra.mxu0 %v325
  %708 = vmatprep.subr.mxu0 %v329
  %709 = vmatpush1.msra.mxu0 %v328
  %710 = vmatprep.subr.mxu0 %v332
  %711 = vmatpush1.msra.mxu0 %v331
  %712 = vmatprep.subr.mxu0 %v335
  %713 = vmatpush1.msra.mxu0 %v334
  %714 = vmatprep.subr.mxu0 %v338
  %715 = vmatpush1.msra.mxu0 %v337
  %716 = vmatprep.subr.mxu0 %v341
  %717 = vmatpush1.msra.mxu0 %v340
  %718 = vmatprep.subr.mxu0 %v344
  %719 = vmatpush1.msra.mxu0 %v343
  %720 = vmatprep.subr.mxu0 %v347
  %721 = vmatpush1.msra.mxu0 %v346
  %722 = vmatprep.subr.mxu0 %v350
  %723 = vmatpush1.msra.mxu0 %v349
  %724 = vmatprep.subr.mxu0 %v353
  %725 = vmatpush1.msra.mxu0 %v352
  %726 = vmatprep.subr.mxu0 %v356
  %727 = vmatpush1.msra.mxu0 %v355
  %728 = vmatprep.subr.mxu0 %v359
  %729 = vmatpush1.msra.mxu0 %v358
  %730 = vmatprep.subr.mxu0 %v362
  %731 = vmatpush1.msra.mxu0 %v361
  %732 = vmatprep.subr.mxu0 0.0
  %733 = vmatpush1.msra.mxu0 0.0
  %734 = vmatprep.subr.mxu0 0.0
  %735 = vmatpush1.msra.mxu0 0.0
  %736 = vmatprep.subr.mxu0 0.0
  %737 = vmatpush1.msra.mxu0 0.0
  %738 = vmatprep.subr.mxu0 0.0
  %739 = vmatpush1.msra.mxu0 0.0
  %740 = vmatprep.subr.mxu0 0.0
  %741 = vmatpush1.msra.mxu0 0.0
  %742 = vmatprep.subr.mxu0 0.0
  %743 = vmatpush1.msra.mxu0 0.0
  %744 = vmatprep.subr.mxu0 0.0
  %745 = vmatpush1.msra.mxu0 0.0
  %746 = vmatprep.subr.mxu0 0.0
  %747 = vmatpush1.msra.mxu0 0.0
  %748 = vmatprep.subr.mxu0 0.0
  %749 = vmatpush1.msra.mxu0 0.0
  %750 = vmatprep.subr.mxu0 0.0
  %751 = vmatpush1.msra.mxu0 0.0
  %752 = vmatprep.subr.mxu0 0.0
  %753 = vmatpush1.msra.mxu0 0.0
  %754 = vmatprep.subr.mxu0 0.0
  %755 = vmatpush1.msra.mxu0 0.0
  %756 = vmatprep.subr.mxu0 0.0
  %757 = vmatpush1.msra.mxu0 0.0
  %758 = vmatprep.subr.mxu0 0.0
  %759 = vmatpush1.msra.mxu0 0.0
  %760 = vmatprep.subr.mxu0 0.0
  %761 = vmatpush1.msra.mxu0 0.0
  %762 = vmatprep.subr.mxu0 0.0
  %763 = vmatpush1.msra.mxu0 0.0
  %764 = vmatprep.mubr.f32.mxu0 0.0
  %765 = vmatmul.mubr.f32.gmra.mrb[0].mxu0 %v699
  %v766 = vpop.f32.mrb[0].mxu0
  %v767 = vadd.f32 0.0, %v766
  %v768 = vpop.f32.mrb[0].mxu0
  %v769 = vadd.f32 0.0, %v768
  %770 = vdwg.mxu0
  %771 = vmatprep.subr.mxu0 0.0
  %772 = vmatpush1.msra.mxu0 %v318
  %773 = vmatprep.subr.mxu0 0.0
  %774 = vmatpush1.msra.mxu0 %v321
  %775 = vmatprep.subr.mxu0 0.0
  %776 = vmatpush1.msra.mxu0 %v324
  %777 = vmatprep.subr.mxu0 0.0
  %778 = vmatpush1.msra.mxu0 %v327
  %779 = vmatprep.subr.mxu0 0.0
  %780 = vmatpush1.msra.mxu0 %v330
  %781 = vmatprep.subr.mxu0 0.0
  %782 = vmatpush1.msra.mxu0 %v333
  %783 = vmatprep.subr.mxu0 0.0
  %784 = vmatpush1.msra.mxu0 %v336
  %785 = vmatprep.subr.mxu0 0.0
  %786 = vmatpush1.msra.mxu0 %v339
  %787 = vmatprep.subr.mxu0 0.0
  %788 = vmatpush1.msra.mxu0 %v342
  %789 = vmatprep.subr.mxu0 0.0
  %790 = vmatpush1.msra.mxu0 %v345
  %791 = vmatprep.subr.mxu0 0.0
  %792 = vmatpush1.msra.mxu0 %v348
  %793 = vmatprep.subr.mxu0 0.0
  %794 = vmatpush1.msra.mxu0 %v351
  %795 = vmatprep.subr.mxu0 0.0
  %796 = vmatpush1.msra.mxu0 %v354
  %797 = vmatprep.subr.mxu0 0.0
  %798 = vmatpush1.msra.mxu0 %v357
  %799 = vmatprep.subr.mxu0 0.0
  %800 = vmatpush1.msra.mxu0 %v360
  %801 = vmatprep.subr.mxu0 0.0
  %802 = vmatpush1.msra.mxu0 %v363
  %803 = vmatprep.subr.mxu0 0.0
  %804 = vmatpush1.msra.mxu0 0.0
  %805 = vmatprep.subr.mxu0 0.0
  %806 = vmatpush1.msra.mxu0 0.0
  %807 = vmatprep.subr.mxu0 0.0
  %808 = vmatpush1.msra.mxu0 0.0
  %809 = vmatprep.subr.mxu0 0.0
  %810 = vmatpush1.msra.mxu0 0.0
  %811 = vmatprep.subr.mxu0 0.0
  %812 = vmatpush1.msra.mxu0 0.0
  %813 = vmatprep.subr.mxu0 0.0
  %814 = vmatpush1.msra.mxu0 0.0
  %815 = vmatprep.subr.mxu0 0.0
  %816 = vmatpush1.msra.mxu0 0.0
  %817 = vmatprep.subr.mxu0 0.0
  %818 = vmatpush1.msra.mxu0 0.0
  %819 = vmatprep.subr.mxu0 0.0
  %820 = vmatpush1.msra.mxu0 0.0
  %821 = vmatprep.subr.mxu0 0.0
  %822 = vmatpush1.msra.mxu0 0.0
  %823 = vmatprep.subr.mxu0 0.0
  %824 = vmatpush1.msra.mxu0 0.0
  %825 = vmatprep.subr.mxu0 0.0
  %826 = vmatpush1.msra.mxu0 0.0
  %827 = vmatprep.subr.mxu0 0.0
  %828 = vmatpush1.msra.mxu0 0.0
  %829 = vmatprep.subr.mxu0 0.0
  %830 = vmatpush1.msra.mxu0 0.0
  %831 = vmatprep.subr.mxu0 0.0
  %832 = vmatpush1.msra.mxu0 0.0
  %833 = vmatprep.subr.mxu0 0.0
  %834 = vmatpush1.msra.mxu0 0.0
  %835 = vmatprep.mubr.f32.mxu0 0.0
  %836 = vmatmul.mubr.f32.gmra.mrb[0].mxu0 %v699
  %v837 = vpop.f32.mrb[0].mxu0
  %v838 = vadd.f32 0.0, %v837
  %v839 = vpop.f32.mrb[0].mxu0
  %840 = vdwg.mxu0
  %v841 = vadd.f32 %v188, %v767
  %v842 = vxor.u32 %v841, 2147483648
  %v843 = vmul.f32 %v842, 1.442695
  %v844 = vpow.pop %v843
  %v845 = vadd.f32 %v844, 1.0
  %v846 = vrcp.pop %v845
  %v847 = vmul.f32 1.0, %v846
  %v848 = vadd.f32 %v190, %v769
  %v849 = vxor.u32 %v848, 2147483648
  %v850 = vmul.f32 %v849, 1.442695
  %v851 = vpow.pop %v850
  %v852 = vadd.f32 %v851, 1.0
  %v853 = vrcp.pop %v852
  %v854 = vmul.f32 1.0, %v853
  %v855 = vadd.f32 %v838, %v525
  %v856 = vmul.f32 %v847, %v855
  %v857 = vadd.f32 %v293, %v856
  %v858 = vtanh.pop %v857
  %v859 = vsub.f32 %v699, %v858
  %v860 = vmul.f32 %v854, %v859
  %v861 = vadd.f32 %v858, %v860
  %vm862 = vcmp.gt.s32.totalorder %v365, 2
  %v863 = vsel %vm862, %v861, %v699
  %864 = vmatprep.subr.mxu0 %v317
  %865 = vmatpush1.msra.mxu0 %v316
  %866 = vmatprep.subr.mxu0 %v320
  %867 = vmatpush1.msra.mxu0 %v319
  %868 = vmatprep.subr.mxu0 %v323
  %869 = vmatpush1.msra.mxu0 %v322
  %870 = vmatprep.subr.mxu0 %v326
  %871 = vmatpush1.msra.mxu0 %v325
  %872 = vmatprep.subr.mxu0 %v329
  %873 = vmatpush1.msra.mxu0 %v328
  %874 = vmatprep.subr.mxu0 %v332
  %875 = vmatpush1.msra.mxu0 %v331
  %876 = vmatprep.subr.mxu0 %v335
  %877 = vmatpush1.msra.mxu0 %v334
  %878 = vmatprep.subr.mxu0 %v338
  %879 = vmatpush1.msra.mxu0 %v337
  %880 = vmatprep.subr.mxu0 %v341
  %881 = vmatpush1.msra.mxu0 %v340
  %882 = vmatprep.subr.mxu0 %v344
  %883 = vmatpush1.msra.mxu0 %v343
  %884 = vmatprep.subr.mxu0 %v347
  %885 = vmatpush1.msra.mxu0 %v346
  %886 = vmatprep.subr.mxu0 %v350
  %887 = vmatpush1.msra.mxu0 %v349
  %888 = vmatprep.subr.mxu0 %v353
  %889 = vmatpush1.msra.mxu0 %v352
  %890 = vmatprep.subr.mxu0 %v356
  %891 = vmatpush1.msra.mxu0 %v355
  %892 = vmatprep.subr.mxu0 %v359
  %893 = vmatpush1.msra.mxu0 %v358
  %894 = vmatprep.subr.mxu0 %v362
  %895 = vmatpush1.msra.mxu0 %v361
  %896 = vmatprep.subr.mxu0 0.0
  %897 = vmatpush1.msra.mxu0 0.0
  %898 = vmatprep.subr.mxu0 0.0
  %899 = vmatpush1.msra.mxu0 0.0
  %900 = vmatprep.subr.mxu0 0.0
  %901 = vmatpush1.msra.mxu0 0.0
  %902 = vmatprep.subr.mxu0 0.0
  %903 = vmatpush1.msra.mxu0 0.0
  %904 = vmatprep.subr.mxu0 0.0
  %905 = vmatpush1.msra.mxu0 0.0
  %906 = vmatprep.subr.mxu0 0.0
  %907 = vmatpush1.msra.mxu0 0.0
  %908 = vmatprep.subr.mxu0 0.0
  %909 = vmatpush1.msra.mxu0 0.0
  %910 = vmatprep.subr.mxu0 0.0
  %911 = vmatpush1.msra.mxu0 0.0
  %912 = vmatprep.subr.mxu0 0.0
  %913 = vmatpush1.msra.mxu0 0.0
  %914 = vmatprep.subr.mxu0 0.0
  %915 = vmatpush1.msra.mxu0 0.0
  %916 = vmatprep.subr.mxu0 0.0
  %917 = vmatpush1.msra.mxu0 0.0
  %918 = vmatprep.subr.mxu0 0.0
  %919 = vmatpush1.msra.mxu0 0.0
  %920 = vmatprep.subr.mxu0 0.0
  %921 = vmatpush1.msra.mxu0 0.0
  %922 = vmatprep.subr.mxu0 0.0
  %923 = vmatpush1.msra.mxu0 0.0
  %924 = vmatprep.subr.mxu0 0.0
  %925 = vmatpush1.msra.mxu0 0.0
  %926 = vmatprep.subr.mxu0 0.0
  %927 = vmatpush1.msra.mxu0 0.0
  %928 = vmatprep.mubr.f32.mxu0 0.0
  %929 = vmatmul.mubr.f32.gmra.mrb[0].mxu0 %v863
  %v930 = vpop.f32.mrb[0].mxu0
  %v931 = vadd.f32 0.0, %v930
  %v932 = vpop.f32.mrb[0].mxu0
  %v933 = vadd.f32 0.0, %v932
  %934 = vdwg.mxu0
  %935 = vmatprep.subr.mxu0 0.0
  %936 = vmatpush1.msra.mxu0 %v318
  %937 = vmatprep.subr.mxu0 0.0
  %938 = vmatpush1.msra.mxu0 %v321
  %939 = vmatprep.subr.mxu0 0.0
  %940 = vmatpush1.msra.mxu0 %v324
  %941 = vmatprep.subr.mxu0 0.0
  %942 = vmatpush1.msra.mxu0 %v327
  %943 = vmatprep.subr.mxu0 0.0
  %944 = vmatpush1.msra.mxu0 %v330
  %945 = vmatprep.subr.mxu0 0.0
  %946 = vmatpush1.msra.mxu0 %v333
  %947 = vmatprep.subr.mxu0 0.0
  %948 = vmatpush1.msra.mxu0 %v336
  %949 = vmatprep.subr.mxu0 0.0
  %950 = vmatpush1.msra.mxu0 %v339
  %951 = vmatprep.subr.mxu0 0.0
  %952 = vmatpush1.msra.mxu0 %v342
  %953 = vmatprep.subr.mxu0 0.0
  %954 = vmatpush1.msra.mxu0 %v345
  %955 = vmatprep.subr.mxu0 0.0
  %956 = vmatpush1.msra.mxu0 %v348
  %957 = vmatprep.subr.mxu0 0.0
  %958 = vmatpush1.msra.mxu0 %v351
  %959 = vmatprep.subr.mxu0 0.0
  %960 = vmatpush1.msra.mxu0 %v354
  %961 = vmatprep.subr.mxu0 0.0
  %962 = vmatpush1.msra.mxu0 %v357
  %963 = vmatprep.subr.mxu0 0.0
  %964 = vmatpush1.msra.mxu0 %v360
  %965 = vmatprep.subr.mxu0 0.0
  %966 = vmatpush1.msra.mxu0 %v363
  %967 = vmatprep.subr.mxu0 0.0
  %968 = vmatpush1.msra.mxu0 0.0
  %969 = vmatprep.subr.mxu0 0.0
  %970 = vmatpush1.msra.mxu0 0.0
  %971 = vmatprep.subr.mxu0 0.0
  %972 = vmatpush1.msra.mxu0 0.0
  %973 = vmatprep.subr.mxu0 0.0
  %974 = vmatpush1.msra.mxu0 0.0
  %975 = vmatprep.subr.mxu0 0.0
  %976 = vmatpush1.msra.mxu0 0.0
  %977 = vmatprep.subr.mxu0 0.0
  %978 = vmatpush1.msra.mxu0 0.0
  %979 = vmatprep.subr.mxu0 0.0
  %980 = vmatpush1.msra.mxu0 0.0
  %981 = vmatprep.subr.mxu0 0.0
  %982 = vmatpush1.msra.mxu0 0.0
  %983 = vmatprep.subr.mxu0 0.0
  %984 = vmatpush1.msra.mxu0 0.0
  %985 = vmatprep.subr.mxu0 0.0
  %986 = vmatpush1.msra.mxu0 0.0
  %987 = vmatprep.subr.mxu0 0.0
  %988 = vmatpush1.msra.mxu0 0.0
  %989 = vmatprep.subr.mxu0 0.0
  %990 = vmatpush1.msra.mxu0 0.0
  %991 = vmatprep.subr.mxu0 0.0
  %992 = vmatpush1.msra.mxu0 0.0
  %993 = vmatprep.subr.mxu0 0.0
  %994 = vmatpush1.msra.mxu0 0.0
  %995 = vmatprep.subr.mxu0 0.0
  %996 = vmatpush1.msra.mxu0 0.0
  %997 = vmatprep.subr.mxu0 0.0
  %998 = vmatpush1.msra.mxu0 0.0
  %999 = vmatprep.mubr.f32.mxu0 0.0
  %1000 = vmatmul.mubr.f32.gmra.mrb[0].mxu0 %v863
  %v1001 = vpop.f32.mrb[0].mxu0
  %v1002 = vadd.f32 0.0, %v1001
  %v1003 = vpop.f32.mrb[0].mxu0
  %1004 = vdwg.mxu0
  %v1005 = vadd.f32 %v194, %v931
  %v1006 = vxor.u32 %v1005, 2147483648
  %v1007 = vmul.f32 %v1006, 1.442695
  %v1008 = vpow.pop %v1007
  %v1009 = vadd.f32 %v1008, 1.0
  %v1010 = vrcp.pop %v1009
  %v1011 = vmul.f32 1.0, %v1010
  %v1012 = vadd.f32 %v196, %v933
  %v1013 = vxor.u32 %v1012, 2147483648
  %v1014 = vmul.f32 %v1013, 1.442695
  %v1015 = vpow.pop %v1014
  %v1016 = vadd.f32 %v1015, 1.0
  %v1017 = vrcp.pop %v1016
  %v1018 = vmul.f32 1.0, %v1017
  %v1019 = vadd.f32 %v1002, %v525
  %v1020 = vmul.f32 %v1011, %v1019
  %v1021 = vadd.f32 %v298, %v1020
  %v1022 = vtanh.pop %v1021
  %v1023 = vsub.f32 %v863, %v1022
  %v1024 = vmul.f32 %v1018, %v1023
  %v1025 = vadd.f32 %v1022, %v1024
  %vm1026 = vcmp.gt.s32.totalorder %v365, 3
  %v1027 = vsel %vm1026, %v1025, %v863
  %1028 = vmatprep.subr.mxu0 %v317
  %1029 = vmatpush1.msra.mxu0 %v316
  %1030 = vmatprep.subr.mxu0 %v320
  %1031 = vmatpush1.msra.mxu0 %v319
  %1032 = vmatprep.subr.mxu0 %v323
  %1033 = vmatpush1.msra.mxu0 %v322
  %1034 = vmatprep.subr.mxu0 %v326
  %1035 = vmatpush1.msra.mxu0 %v325
  %1036 = vmatprep.subr.mxu0 %v329
  %1037 = vmatpush1.msra.mxu0 %v328
  %1038 = vmatprep.subr.mxu0 %v332
  %1039 = vmatpush1.msra.mxu0 %v331
  %1040 = vmatprep.subr.mxu0 %v335
  %1041 = vmatpush1.msra.mxu0 %v334
  %1042 = vmatprep.subr.mxu0 %v338
  %1043 = vmatpush1.msra.mxu0 %v337
  %1044 = vmatprep.subr.mxu0 %v341
  %1045 = vmatpush1.msra.mxu0 %v340
  %1046 = vmatprep.subr.mxu0 %v344
  %1047 = vmatpush1.msra.mxu0 %v343
  %1048 = vmatprep.subr.mxu0 %v347
  %1049 = vmatpush1.msra.mxu0 %v346
  %1050 = vmatprep.subr.mxu0 %v350
  %1051 = vmatpush1.msra.mxu0 %v349
  %1052 = vmatprep.subr.mxu0 %v353
  %1053 = vmatpush1.msra.mxu0 %v352
  %1054 = vmatprep.subr.mxu0 %v356
  %1055 = vmatpush1.msra.mxu0 %v355
  %1056 = vmatprep.subr.mxu0 %v359
  %1057 = vmatpush1.msra.mxu0 %v358
  %1058 = vmatprep.subr.mxu0 %v362
  %1059 = vmatpush1.msra.mxu0 %v361
  %1060 = vmatprep.subr.mxu0 0.0
  %1061 = vmatpush1.msra.mxu0 0.0
  %1062 = vmatprep.subr.mxu0 0.0
  %1063 = vmatpush1.msra.mxu0 0.0
  %1064 = vmatprep.subr.mxu0 0.0
  %1065 = vmatpush1.msra.mxu0 0.0
  %1066 = vmatprep.subr.mxu0 0.0
  %1067 = vmatpush1.msra.mxu0 0.0
  %1068 = vmatprep.subr.mxu0 0.0
  %1069 = vmatpush1.msra.mxu0 0.0
  %1070 = vmatprep.subr.mxu0 0.0
  %1071 = vmatpush1.msra.mxu0 0.0
  %1072 = vmatprep.subr.mxu0 0.0
  %1073 = vmatpush1.msra.mxu0 0.0
  %1074 = vmatprep.subr.mxu0 0.0
  %1075 = vmatpush1.msra.mxu0 0.0
  %1076 = vmatprep.subr.mxu0 0.0
  %1077 = vmatpush1.msra.mxu0 0.0
  %1078 = vmatprep.subr.mxu0 0.0
  %1079 = vmatpush1.msra.mxu0 0.0
  %1080 = vmatprep.subr.mxu0 0.0
  %1081 = vmatpush1.msra.mxu0 0.0
  %1082 = vmatprep.subr.mxu0 0.0
  %1083 = vmatpush1.msra.mxu0 0.0
  %1084 = vmatprep.subr.mxu0 0.0
  %1085 = vmatpush1.msra.mxu0 0.0
  %1086 = vmatprep.subr.mxu0 0.0
  %1087 = vmatpush1.msra.mxu0 0.0
  %1088 = vmatprep.subr.mxu0 0.0
  %1089 = vmatpush1.msra.mxu0 0.0
  %1090 = vmatprep.subr.mxu0 0.0
  %1091 = vmatpush1.msra.mxu0 0.0
  %1092 = vmatprep.mubr.f32.mxu0 0.0
  %1093 = vmatmul.mubr.f32.gmra.mrb[0].mxu0 %v1027
  %v1094 = vpop.f32.mrb[0].mxu0
  %v1095 = vadd.f32 0.0, %v1094
  %v1096 = vpop.f32.mrb[0].mxu0
  %v1097 = vadd.f32 0.0, %v1096
  %1098 = vdwg.mxu0
  %1099 = vmatprep.subr.mxu0 0.0
  %1100 = vmatpush1.msra.mxu0 %v318
  %1101 = vmatprep.subr.mxu0 0.0
  %1102 = vmatpush1.msra.mxu0 %v321
  %1103 = vmatprep.subr.mxu0 0.0
  %1104 = vmatpush1.msra.mxu0 %v324
  %1105 = vmatprep.subr.mxu0 0.0
  %1106 = vmatpush1.msra.mxu0 %v327
  %1107 = vmatprep.subr.mxu0 0.0
  %1108 = vmatpush1.msra.mxu0 %v330
  %1109 = vmatprep.subr.mxu0 0.0
  %1110 = vmatpush1.msra.mxu0 %v333
  %1111 = vmatprep.subr.mxu0 0.0
  %1112 = vmatpush1.msra.mxu0 %v336
  %1113 = vmatprep.subr.mxu0 0.0
  %1114 = vmatpush1.msra.mxu0 %v339
  %1115 = vmatprep.subr.mxu0 0.0
  %1116 = vmatpush1.msra.mxu0 %v342
  %1117 = vmatprep.subr.mxu0 0.0
  %1118 = vmatpush1.msra.mxu0 %v345
  %1119 = vmatprep.subr.mxu0 0.0
  %1120 = vmatpush1.msra.mxu0 %v348
  %1121 = vmatprep.subr.mxu0 0.0
  %1122 = vmatpush1.msra.mxu0 %v351
  %1123 = vmatprep.subr.mxu0 0.0
  %1124 = vmatpush1.msra.mxu0 %v354
  %1125 = vmatprep.subr.mxu0 0.0
  %1126 = vmatpush1.msra.mxu0 %v357
  %1127 = vmatprep.subr.mxu0 0.0
  %1128 = vmatpush1.msra.mxu0 %v360
  %1129 = vmatprep.subr.mxu0 0.0
  %1130 = vmatpush1.msra.mxu0 %v363
  %1131 = vmatprep.subr.mxu0 0.0
  %1132 = vmatpush1.msra.mxu0 0.0
  %1133 = vmatprep.subr.mxu0 0.0
  %1134 = vmatpush1.msra.mxu0 0.0
  %1135 = vmatprep.subr.mxu0 0.0
  %1136 = vmatpush1.msra.mxu0 0.0
  %1137 = vmatprep.subr.mxu0 0.0
  %1138 = vmatpush1.msra.mxu0 0.0
  %1139 = vmatprep.subr.mxu0 0.0
  %1140 = vmatpush1.msra.mxu0 0.0
  %1141 = vmatprep.subr.mxu0 0.0
  %1142 = vmatpush1.msra.mxu0 0.0
  %1143 = vmatprep.subr.mxu0 0.0
  %1144 = vmatpush1.msra.mxu0 0.0
  %1145 = vmatprep.subr.mxu0 0.0
  %1146 = vmatpush1.msra.mxu0 0.0
  %1147 = vmatprep.subr.mxu0 0.0
  %1148 = vmatpush1.msra.mxu0 0.0
  %1149 = vmatprep.subr.mxu0 0.0
  %1150 = vmatpush1.msra.mxu0 0.0
  %1151 = vmatprep.subr.mxu0 0.0
  %1152 = vmatpush1.msra.mxu0 0.0
  %1153 = vmatprep.subr.mxu0 0.0
  %1154 = vmatpush1.msra.mxu0 0.0
  %1155 = vmatprep.subr.mxu0 0.0
  %1156 = vmatpush1.msra.mxu0 0.0
  %1157 = vmatprep.subr.mxu0 0.0
  %1158 = vmatpush1.msra.mxu0 0.0
  %1159 = vmatprep.subr.mxu0 0.0
  %1160 = vmatpush1.msra.mxu0 0.0
  %1161 = vmatprep.subr.mxu0 0.0
  %1162 = vmatpush1.msra.mxu0 0.0
  %1163 = vmatprep.mubr.f32.mxu0 0.0
  %1164 = vmatmul.mubr.f32.gmra.mrb[0].mxu0 %v1027
  %v1165 = vpop.f32.mrb[0].mxu0
  %v1166 = vadd.f32 0.0, %v1165
  %v1167 = vpop.f32.mrb[0].mxu0
  %1168 = vdwg.mxu0
  %v1169 = vadd.f32 %v200, %v1095
  %v1170 = vxor.u32 %v1169, 2147483648
  %v1171 = vmul.f32 %v1170, 1.442695
  %v1172 = vpow.pop %v1171
  %v1173 = vadd.f32 %v1172, 1.0
  %v1174 = vrcp.pop %v1173
  %v1175 = vmul.f32 1.0, %v1174
  %v1176 = vadd.f32 %v202, %v1097
  %v1177 = vxor.u32 %v1176, 2147483648
  %v1178 = vmul.f32 %v1177, 1.442695
  %v1179 = vpow.pop %v1178
  %v1180 = vadd.f32 %v1179, 1.0
  %v1181 = vrcp.pop %v1180
  %v1182 = vmul.f32 1.0, %v1181
  %v1183 = vadd.f32 %v1166, %v525
  %v1184 = vmul.f32 %v1175, %v1183
  %v1185 = vadd.f32 %v303, %v1184
  %v1186 = vtanh.pop %v1185
  %v1187 = vsub.f32 %v1027, %v1186
  %v1188 = vmul.f32 %v1182, %v1187
  %v1189 = vadd.f32 %v1186, %v1188
  %vm1190 = vcmp.gt.s32.totalorder %v365, 4
  %v1191 = vsel %vm1190, %v1189, %v1027
  %1192 = vmatprep.subr.mxu0 %v317
  %1193 = vmatpush1.msra.mxu0 %v316
  %1194 = vmatprep.subr.mxu0 %v320
  %1195 = vmatpush1.msra.mxu0 %v319
  %1196 = vmatprep.subr.mxu0 %v323
  %1197 = vmatpush1.msra.mxu0 %v322
  %1198 = vmatprep.subr.mxu0 %v326
  %1199 = vmatpush1.msra.mxu0 %v325
  %1200 = vmatprep.subr.mxu0 %v329
  %1201 = vmatpush1.msra.mxu0 %v328
  %1202 = vmatprep.subr.mxu0 %v332
  %1203 = vmatpush1.msra.mxu0 %v331
  %1204 = vmatprep.subr.mxu0 %v335
  %1205 = vmatpush1.msra.mxu0 %v334
  %1206 = vmatprep.subr.mxu0 %v338
  %1207 = vmatpush1.msra.mxu0 %v337
  %1208 = vmatprep.subr.mxu0 %v341
  %1209 = vmatpush1.msra.mxu0 %v340
  %1210 = vmatprep.subr.mxu0 %v344
  %1211 = vmatpush1.msra.mxu0 %v343
  %1212 = vmatprep.subr.mxu0 %v347
  %1213 = vmatpush1.msra.mxu0 %v346
  %1214 = vmatprep.subr.mxu0 %v350
  %1215 = vmatpush1.msra.mxu0 %v349
  %1216 = vmatprep.subr.mxu0 %v353
  %1217 = vmatpush1.msra.mxu0 %v352
  %1218 = vmatprep.subr.mxu0 %v356
  %1219 = vmatpush1.msra.mxu0 %v355
  %1220 = vmatprep.subr.mxu0 %v359
  %1221 = vmatpush1.msra.mxu0 %v358
  %1222 = vmatprep.subr.mxu0 %v362
  %1223 = vmatpush1.msra.mxu0 %v361
  %1224 = vmatprep.subr.mxu0 0.0
  %1225 = vmatpush1.msra.mxu0 0.0
  %1226 = vmatprep.subr.mxu0 0.0
  %1227 = vmatpush1.msra.mxu0 0.0
  %1228 = vmatprep.subr.mxu0 0.0
  %1229 = vmatpush1.msra.mxu0 0.0
  %1230 = vmatprep.subr.mxu0 0.0
  %1231 = vmatpush1.msra.mxu0 0.0
  %1232 = vmatprep.subr.mxu0 0.0
  %1233 = vmatpush1.msra.mxu0 0.0
  %1234 = vmatprep.subr.mxu0 0.0
  %1235 = vmatpush1.msra.mxu0 0.0
  %1236 = vmatprep.subr.mxu0 0.0
  %1237 = vmatpush1.msra.mxu0 0.0
  %1238 = vmatprep.subr.mxu0 0.0
  %1239 = vmatpush1.msra.mxu0 0.0
  %1240 = vmatprep.subr.mxu0 0.0
  %1241 = vmatpush1.msra.mxu0 0.0
  %1242 = vmatprep.subr.mxu0 0.0
  %1243 = vmatpush1.msra.mxu0 0.0
  %1244 = vmatprep.subr.mxu0 0.0
  %1245 = vmatpush1.msra.mxu0 0.0
  %1246 = vmatprep.subr.mxu0 0.0
  %1247 = vmatpush1.msra.mxu0 0.0
  %1248 = vmatprep.subr.mxu0 0.0
  %1249 = vmatpush1.msra.mxu0 0.0
  %1250 = vmatprep.subr.mxu0 0.0
  %1251 = vmatpush1.msra.mxu0 0.0
  %1252 = vmatprep.subr.mxu0 0.0
  %1253 = vmatpush1.msra.mxu0 0.0
  %1254 = vmatprep.subr.mxu0 0.0
  %1255 = vmatpush1.msra.mxu0 0.0
  %1256 = vmatprep.mubr.f32.mxu0 0.0
  %1257 = vmatmul.mubr.f32.gmra.mrb[0].mxu0 %v1191
  %v1258 = vpop.f32.mrb[0].mxu0
  %v1259 = vadd.f32 0.0, %v1258
  %v1260 = vpop.f32.mrb[0].mxu0
  %v1261 = vadd.f32 0.0, %v1260
  %1262 = vdwg.mxu0
  %1263 = vmatprep.subr.mxu0 0.0
  %1264 = vmatpush1.msra.mxu0 %v318
  %1265 = vmatprep.subr.mxu0 0.0
  %1266 = vmatpush1.msra.mxu0 %v321
  %1267 = vmatprep.subr.mxu0 0.0
  %1268 = vmatpush1.msra.mxu0 %v324
  %1269 = vmatprep.subr.mxu0 0.0
  %1270 = vmatpush1.msra.mxu0 %v327
  %1271 = vmatprep.subr.mxu0 0.0
  %1272 = vmatpush1.msra.mxu0 %v330
  %1273 = vmatprep.subr.mxu0 0.0
  %1274 = vmatpush1.msra.mxu0 %v333
  %1275 = vmatprep.subr.mxu0 0.0
  %1276 = vmatpush1.msra.mxu0 %v336
  %1277 = vmatprep.subr.mxu0 0.0
  %1278 = vmatpush1.msra.mxu0 %v339
  %1279 = vmatprep.subr.mxu0 0.0
  %1280 = vmatpush1.msra.mxu0 %v342
  %1281 = vmatprep.subr.mxu0 0.0
  %1282 = vmatpush1.msra.mxu0 %v345
  %1283 = vmatprep.subr.mxu0 0.0
  %1284 = vmatpush1.msra.mxu0 %v348
  %1285 = vmatprep.subr.mxu0 0.0
  %1286 = vmatpush1.msra.mxu0 %v351
  %1287 = vmatprep.subr.mxu0 0.0
  %1288 = vmatpush1.msra.mxu0 %v354
  %1289 = vmatprep.subr.mxu0 0.0
  %1290 = vmatpush1.msra.mxu0 %v357
  %1291 = vmatprep.subr.mxu0 0.0
  %1292 = vmatpush1.msra.mxu0 %v360
  %1293 = vmatprep.subr.mxu0 0.0
  %1294 = vmatpush1.msra.mxu0 %v363
  %1295 = vmatprep.subr.mxu0 0.0
  %1296 = vmatpush1.msra.mxu0 0.0
  %1297 = vmatprep.subr.mxu0 0.0
  %1298 = vmatpush1.msra.mxu0 0.0
  %1299 = vmatprep.subr.mxu0 0.0
  %1300 = vmatpush1.msra.mxu0 0.0
  %1301 = vmatprep.subr.mxu0 0.0
  %1302 = vmatpush1.msra.mxu0 0.0
  %1303 = vmatprep.subr.mxu0 0.0
  %1304 = vmatpush1.msra.mxu0 0.0
  %1305 = vmatprep.subr.mxu0 0.0
  %1306 = vmatpush1.msra.mxu0 0.0
  %1307 = vmatprep.subr.mxu0 0.0
  %1308 = vmatpush1.msra.mxu0 0.0
  %1309 = vmatprep.subr.mxu0 0.0
  %1310 = vmatpush1.msra.mxu0 0.0
  %1311 = vmatprep.subr.mxu0 0.0
  %1312 = vmatpush1.msra.mxu0 0.0
  %1313 = vmatprep.subr.mxu0 0.0
  %1314 = vmatpush1.msra.mxu0 0.0
  %1315 = vmatprep.subr.mxu0 0.0
  %1316 = vmatpush1.msra.mxu0 0.0
  %1317 = vmatprep.subr.mxu0 0.0
  %1318 = vmatpush1.msra.mxu0 0.0
  %1319 = vmatprep.subr.mxu0 0.0
  %1320 = vmatpush1.msra.mxu0 0.0
  %1321 = vmatprep.subr.mxu0 0.0
  %1322 = vmatpush1.msra.mxu0 0.0
  %1323 = vmatprep.subr.mxu0 0.0
  %1324 = vmatpush1.msra.mxu0 0.0
  %1325 = vmatprep.subr.mxu0 0.0
  %1326 = vmatpush1.msra.mxu0 0.0
  %1327 = vmatprep.mubr.f32.mxu0 0.0
  %1328 = vmatmul.mubr.f32.gmra.mrb[0].mxu0 %v1191
  %v1329 = vpop.f32.mrb[0].mxu0
  %v1330 = vadd.f32 0.0, %v1329
  %v1331 = vpop.f32.mrb[0].mxu0
  %1332 = vdwg.mxu0
  %v1333 = vadd.f32 %v206, %v1259
  %v1334 = vxor.u32 %v1333, 2147483648
  %v1335 = vmul.f32 %v1334, 1.442695
  %v1336 = vpow.pop %v1335
  %v1337 = vadd.f32 %v1336, 1.0
  %v1338 = vrcp.pop %v1337
  %v1339 = vmul.f32 1.0, %v1338
  %v1340 = vadd.f32 %v208, %v1261
  %v1341 = vxor.u32 %v1340, 2147483648
  %v1342 = vmul.f32 %v1341, 1.442695
  %v1343 = vpow.pop %v1342
  %v1344 = vadd.f32 %v1343, 1.0
  %v1345 = vrcp.pop %v1344
  %v1346 = vmul.f32 1.0, %v1345
  %v1347 = vadd.f32 %v1330, %v525
  %v1348 = vmul.f32 %v1339, %v1347
  %v1349 = vadd.f32 %v308, %v1348
  %v1350 = vtanh.pop %v1349
  %v1351 = vsub.f32 %v1191, %v1350
  %v1352 = vmul.f32 %v1346, %v1351
  %v1353 = vadd.f32 %v1350, %v1352
  %vm1354 = vcmp.gt.s32.totalorder %v365, 5
  %v1355 = vsel %vm1354, %v1353, %v1191
  %1356 = vmatprep.subr.mxu0 %v317
  %1357 = vmatpush1.msra.mxu0 %v316
  %1358 = vmatprep.subr.mxu0 %v320
  %1359 = vmatpush1.msra.mxu0 %v319
  %1360 = vmatprep.subr.mxu0 %v323
  %1361 = vmatpush1.msra.mxu0 %v322
  %1362 = vmatprep.subr.mxu0 %v326
  %1363 = vmatpush1.msra.mxu0 %v325
  %1364 = vmatprep.subr.mxu0 %v329
  %1365 = vmatpush1.msra.mxu0 %v328
  %1366 = vmatprep.subr.mxu0 %v332
  %1367 = vmatpush1.msra.mxu0 %v331
  %1368 = vmatprep.subr.mxu0 %v335
  %1369 = vmatpush1.msra.mxu0 %v334
  %1370 = vmatprep.subr.mxu0 %v338
  %1371 = vmatpush1.msra.mxu0 %v337
  %1372 = vmatprep.subr.mxu0 %v341
  %1373 = vmatpush1.msra.mxu0 %v340
  %1374 = vmatprep.subr.mxu0 %v344
  %1375 = vmatpush1.msra.mxu0 %v343
  %1376 = vmatprep.subr.mxu0 %v347
  %1377 = vmatpush1.msra.mxu0 %v346
  %1378 = vmatprep.subr.mxu0 %v350
  %1379 = vmatpush1.msra.mxu0 %v349
  %1380 = vmatprep.subr.mxu0 %v353
  %1381 = vmatpush1.msra.mxu0 %v352
  %1382 = vmatprep.subr.mxu0 %v356
  %1383 = vmatpush1.msra.mxu0 %v355
  %1384 = vmatprep.subr.mxu0 %v359
  %1385 = vmatpush1.msra.mxu0 %v358
  %1386 = vmatprep.subr.mxu0 %v362
  %1387 = vmatpush1.msra.mxu0 %v361
  %1388 = vmatprep.subr.mxu0 0.0
  %1389 = vmatpush1.msra.mxu0 0.0
  %1390 = vmatprep.subr.mxu0 0.0
  %1391 = vmatpush1.msra.mxu0 0.0
  %1392 = vmatprep.subr.mxu0 0.0
  %1393 = vmatpush1.msra.mxu0 0.0
  %1394 = vmatprep.subr.mxu0 0.0
  %1395 = vmatpush1.msra.mxu0 0.0
  %1396 = vmatprep.subr.mxu0 0.0
  %1397 = vmatpush1.msra.mxu0 0.0
  %1398 = vmatprep.subr.mxu0 0.0
  %1399 = vmatpush1.msra.mxu0 0.0
  %1400 = vmatprep.subr.mxu0 0.0
  %1401 = vmatpush1.msra.mxu0 0.0
  %1402 = vmatprep.subr.mxu0 0.0
  %1403 = vmatpush1.msra.mxu0 0.0
  %1404 = vmatprep.subr.mxu0 0.0
  %1405 = vmatpush1.msra.mxu0 0.0
  %1406 = vmatprep.subr.mxu0 0.0
  %1407 = vmatpush1.msra.mxu0 0.0
  %1408 = vmatprep.subr.mxu0 0.0
  %1409 = vmatpush1.msra.mxu0 0.0
  %1410 = vmatprep.subr.mxu0 0.0
  %1411 = vmatpush1.msra.mxu0 0.0
  %1412 = vmatprep.subr.mxu0 0.0
  %1413 = vmatpush1.msra.mxu0 0.0
  %1414 = vmatprep.subr.mxu0 0.0
  %1415 = vmatpush1.msra.mxu0 0.0
  %1416 = vmatprep.subr.mxu0 0.0
  %1417 = vmatpush1.msra.mxu0 0.0
  %1418 = vmatprep.subr.mxu0 0.0
  %1419 = vmatpush1.msra.mxu0 0.0
  %1420 = vmatprep.mubr.f32.mxu0 0.0
  %1421 = vmatmul.mubr.f32.gmra.mrb[0].mxu0 %v1355
  %v1422 = vpop.f32.mrb[0].mxu0
  %v1423 = vadd.f32 0.0, %v1422
  %v1424 = vpop.f32.mrb[0].mxu0
  %v1425 = vadd.f32 0.0, %v1424
  %1426 = vdwg.mxu0
  %1427 = vmatprep.subr.mxu0 0.0
  %1428 = vmatpush1.msra.mxu0 %v318
  %1429 = vmatprep.subr.mxu0 0.0
  %1430 = vmatpush1.msra.mxu0 %v321
  %1431 = vmatprep.subr.mxu0 0.0
  %1432 = vmatpush1.msra.mxu0 %v324
  %1433 = vmatprep.subr.mxu0 0.0
  %1434 = vmatpush1.msra.mxu0 %v327
  %1435 = vmatprep.subr.mxu0 0.0
  %1436 = vmatpush1.msra.mxu0 %v330
  %1437 = vmatprep.subr.mxu0 0.0
  %1438 = vmatpush1.msra.mxu0 %v333
  %1439 = vmatprep.subr.mxu0 0.0
  %1440 = vmatpush1.msra.mxu0 %v336
  %1441 = vmatprep.subr.mxu0 0.0
  %1442 = vmatpush1.msra.mxu0 %v339
  %1443 = vmatprep.subr.mxu0 0.0
  %1444 = vmatpush1.msra.mxu0 %v342
  %1445 = vmatprep.subr.mxu0 0.0
  %1446 = vmatpush1.msra.mxu0 %v345
  %1447 = vmatprep.subr.mxu0 0.0
  %1448 = vmatpush1.msra.mxu0 %v348
  %1449 = vmatprep.subr.mxu0 0.0
  %1450 = vmatpush1.msra.mxu0 %v351
  %1451 = vmatprep.subr.mxu0 0.0
  %1452 = vmatpush1.msra.mxu0 %v354
  %1453 = vmatprep.subr.mxu0 0.0
  %1454 = vmatpush1.msra.mxu0 %v357
  %1455 = vmatprep.subr.mxu0 0.0
  %1456 = vmatpush1.msra.mxu0 %v360
  %1457 = vmatprep.subr.mxu0 0.0
  %1458 = vmatpush1.msra.mxu0 %v363
  %1459 = vmatprep.subr.mxu0 0.0
  %1460 = vmatpush1.msra.mxu0 0.0
  %1461 = vmatprep.subr.mxu0 0.0
  %1462 = vmatpush1.msra.mxu0 0.0
  %1463 = vmatprep.subr.mxu0 0.0
  %1464 = vmatpush1.msra.mxu0 0.0
  %1465 = vmatprep.subr.mxu0 0.0
  %1466 = vmatpush1.msra.mxu0 0.0
  %1467 = vmatprep.subr.mxu0 0.0
  %1468 = vmatpush1.msra.mxu0 0.0
  %1469 = vmatprep.subr.mxu0 0.0
  %1470 = vmatpush1.msra.mxu0 0.0
  %1471 = vmatprep.subr.mxu0 0.0
  %1472 = vmatpush1.msra.mxu0 0.0
  %1473 = vmatprep.subr.mxu0 0.0
  %1474 = vmatpush1.msra.mxu0 0.0
  %1475 = vmatprep.subr.mxu0 0.0
  %1476 = vmatpush1.msra.mxu0 0.0
  %1477 = vmatprep.subr.mxu0 0.0
  %1478 = vmatpush1.msra.mxu0 0.0
  %1479 = vmatprep.subr.mxu0 0.0
  %1480 = vmatpush1.msra.mxu0 0.0
  %1481 = vmatprep.subr.mxu0 0.0
  %1482 = vmatpush1.msra.mxu0 0.0
  %1483 = vmatprep.subr.mxu0 0.0
  %1484 = vmatpush1.msra.mxu0 0.0
  %1485 = vmatprep.subr.mxu0 0.0
  %1486 = vmatpush1.msra.mxu0 0.0
  %1487 = vmatprep.subr.mxu0 0.0
  %1488 = vmatpush1.msra.mxu0 0.0
  %1489 = vmatprep.subr.mxu0 0.0
  %1490 = vmatpush1.msra.mxu0 0.0
  %1491 = vmatprep.mubr.f32.mxu0 0.0
  %1492 = vmatmul.mubr.f32.gmra.mrb[0].mxu0 %v1355
  %v1493 = vpop.f32.mrb[0].mxu0
  %v1494 = vadd.f32 0.0, %v1493
  %v1495 = vpop.f32.mrb[0].mxu0
  %1496 = vdwg.mxu0
  %v1497 = vadd.f32 %v212, %v1423
  %v1498 = vxor.u32 %v1497, 2147483648
  %v1499 = vmul.f32 %v1498, 1.442695
  %v1500 = vpow.pop %v1499
  %v1501 = vadd.f32 %v1500, 1.0
  %v1502 = vrcp.pop %v1501
  %v1503 = vmul.f32 1.0, %v1502
  %v1504 = vadd.f32 %v214, %v1425
  %v1505 = vxor.u32 %v1504, 2147483648
  %v1506 = vmul.f32 %v1505, 1.442695
  %v1507 = vpow.pop %v1506
  %v1508 = vadd.f32 %v1507, 1.0
  %v1509 = vrcp.pop %v1508
  %v1510 = vmul.f32 1.0, %v1509
  %v1511 = vadd.f32 %v1494, %v525
  %v1512 = vmul.f32 %v1503, %v1511
  %v1513 = vadd.f32 %v313, %v1512
  %v1514 = vtanh.pop %v1513
  %v1515 = vsub.f32 %v1355, %v1514
  %v1516 = vmul.f32 %v1510, %v1515
  %v1517 = vadd.f32 %v1514, %v1516
  %vm1518 = vcmp.gt.s32.totalorder %v365, 6
  %v1519 = vsel %vm1518, %v1517, %v1355
  %v1520 = vld [vmem:[%s6] sm:$0xff]
  %v1521 = vld [vmem:[%s6 + $0x8] sm:$0xff]
  %v1522 = vld [vmem:[%s6 + $0x10] sm:$0xff]
  %v1523 = vld [vmem:[%s6 + $0x18] sm:$0xff]
  %v1524 = vld [vmem:[%s6 + $0x20] sm:$0xff]
  %v1525 = vld [vmem:[%s6 + $0x28] sm:$0xff]
  %v1526 = vld [vmem:[%s6 + $0x30] sm:$0xff]
  %v1527 = vld [vmem:[%s6 + $0x38] sm:$0xff]
  %v1528 = vld [vmem:[%s6 + $0x40] sm:$0xff]
  %v1529 = vld [vmem:[%s6 + $0x48] sm:$0xff]
  %v1530 = vld [vmem:[%s6 + $0x50] sm:$0xff]
  %v1531 = vld [vmem:[%s6 + $0x58] sm:$0xff]
  %v1532 = vld [vmem:[%s6 + $0x60] sm:$0xff]
  %v1533 = vld [vmem:[%s6 + $0x68] sm:$0xff]
  %v1534 = vld [vmem:[%s6 + $0x70] sm:$0xff]
  %v1535 = vld [vmem:[%s6 + $0x78] sm:$0xff]
  %v1536 = vld [vmem:[%s7] sm:$0x1]
  %v1538 = vlaneseq
  %v1539 = vshrl.u32 %v1538, 7
  %v1540 = vsub.s32 0, %v1539
  %v1541 = vrot.slane %v1536, %v1540
  %1543 = vmatprep.subr.mxu0 0.0
  %1544 = vmatpush1.msra.mxu0 %v1520
  %1545 = vmatprep.subr.mxu0 0.0
  %1546 = vmatpush1.msra.mxu0 %v1521
  %1547 = vmatprep.subr.mxu0 0.0
  %1548 = vmatpush1.msra.mxu0 %v1522
  %1549 = vmatprep.subr.mxu0 0.0
  %1550 = vmatpush1.msra.mxu0 %v1523
  %1551 = vmatprep.subr.mxu0 0.0
  %1552 = vmatpush1.msra.mxu0 %v1524
  %1553 = vmatprep.subr.mxu0 0.0
  %1554 = vmatpush1.msra.mxu0 %v1525
  %1555 = vmatprep.subr.mxu0 0.0
  %1556 = vmatpush1.msra.mxu0 %v1526
  %1557 = vmatprep.subr.mxu0 0.0
  %1558 = vmatpush1.msra.mxu0 %v1527
  %1559 = vmatprep.subr.mxu0 0.0
  %1560 = vmatpush1.msra.mxu0 %v1528
  %1561 = vmatprep.subr.mxu0 0.0
  %1562 = vmatpush1.msra.mxu0 %v1529
  %1563 = vmatprep.subr.mxu0 0.0
  %1564 = vmatpush1.msra.mxu0 %v1530
  %1565 = vmatprep.subr.mxu0 0.0
  %1566 = vmatpush1.msra.mxu0 %v1531
  %1567 = vmatprep.subr.mxu0 0.0
  %1568 = vmatpush1.msra.mxu0 %v1532
  %1569 = vmatprep.subr.mxu0 0.0
  %1570 = vmatpush1.msra.mxu0 %v1533
  %1571 = vmatprep.subr.mxu0 0.0
  %1572 = vmatpush1.msra.mxu0 %v1534
  %1573 = vmatprep.subr.mxu0 0.0
  %1574 = vmatpush1.msra.mxu0 %v1535
  %1575 = vmatprep.subr.mxu0 0.0
  %1576 = vmatpush1.msra.mxu0 0.0
  %1577 = vmatprep.subr.mxu0 0.0
  %1578 = vmatpush1.msra.mxu0 0.0
  %1579 = vmatprep.subr.mxu0 0.0
  %1580 = vmatpush1.msra.mxu0 0.0
  %1581 = vmatprep.subr.mxu0 0.0
  %1582 = vmatpush1.msra.mxu0 0.0
  %1583 = vmatprep.subr.mxu0 0.0
  %1584 = vmatpush1.msra.mxu0 0.0
  %1585 = vmatprep.subr.mxu0 0.0
  %1586 = vmatpush1.msra.mxu0 0.0
  %1587 = vmatprep.subr.mxu0 0.0
  %1588 = vmatpush1.msra.mxu0 0.0
  %1589 = vmatprep.subr.mxu0 0.0
  %1590 = vmatpush1.msra.mxu0 0.0
  %1591 = vmatprep.subr.mxu0 0.0
  %1592 = vmatpush1.msra.mxu0 0.0
  %1593 = vmatprep.subr.mxu0 0.0
  %1594 = vmatpush1.msra.mxu0 0.0
  %1595 = vmatprep.subr.mxu0 0.0
  %1596 = vmatpush1.msra.mxu0 0.0
  %1597 = vmatprep.subr.mxu0 0.0
  %1598 = vmatpush1.msra.mxu0 0.0
  %1599 = vmatprep.subr.mxu0 0.0
  %1600 = vmatpush1.msra.mxu0 0.0
  %1601 = vmatprep.subr.mxu0 0.0
  %1602 = vmatpush1.msra.mxu0 0.0
  %1603 = vmatprep.subr.mxu0 0.0
  %1604 = vmatpush1.msra.mxu0 0.0
  %1605 = vmatprep.subr.mxu0 0.0
  %1606 = vmatpush1.msra.mxu0 0.0
  %1607 = vmatprep.mubr.f32.mxu0 0.0
  %1608 = vmatmul.mubr.f32.gmra.mrb[0].mxu0 %v1519
  %v1609 = vpop.f32.mrb[0].mxu0
  %v1610 = vadd.f32 %v1541, %v1609
  %v1611 = vpop.f32.mrb[0].mxu0
  %1612 = vdwg.mxu0
  %v1613 = vmax.f32 %v1610, 0.0
  %v1614 = vld [vmem:[%s8] sm:$0x1]
  %v1615 = vld [vmem:[#allocation2] sm:$0x1]
  %1617 = vset.pattern.permute.xlu0 0
  %1618 = vperm.xlu0 %1617, %v1615
  %v1619 = vpop.permute.xlu0 %1618
  %v1621 = vlaneseq
  %v1622 = vshrl.u32 %v1621, 7
  %v1623 = vsub.s32 0, %v1622
  %v1624 = vrot.slane %v1619, %v1623
  %vm1625 = vcmask 261120
  %v1627 = vsel %vm1625, %v1614, 0
  %v1630 = vsel %vm1625, %v1613, 0
  %1632 = vmatprep.subr.mxu0 0.0
  %1633 = vmatpush1.xpose.msra.mxu0 %v1630
  %1634 = vmatprep.subr.mxu0 0.0
  %1635 = vmatpush1.xpose.msra.mxu0 0.0
  %1636 = vmatprep.subr.mxu0 0.0
  %1637 = vmatpush1.xpose.msra.mxu0 0.0
  %1638 = vmatprep.subr.mxu0 0.0
  %1639 = vmatpush1.xpose.msra.mxu0 0.0
  %1640 = vmatprep.subr.mxu0 0.0
  %1641 = vmatpush1.xpose.msra.mxu0 0.0
  %1642 = vmatprep.subr.mxu0 0.0
  %1643 = vmatpush1.xpose.msra.mxu0 0.0
  %1644 = vmatprep.subr.mxu0 0.0
  %1645 = vmatpush1.xpose.msra.mxu0 0.0
  %1646 = vmatprep.subr.mxu0 0.0
  %1647 = vmatpush1.xpose.msra.mxu0 0.0
  %1648 = vmatprep.subr.mxu0 0.0
  %1649 = vmatpush1.xpose.msra.mxu0 0.0
  %1650 = vmatprep.subr.mxu0 0.0
  %1651 = vmatpush1.xpose.msra.mxu0 0.0
  %1652 = vmatprep.subr.mxu0 0.0
  %1653 = vmatpush1.xpose.msra.mxu0 0.0
  %1654 = vmatprep.subr.mxu0 0.0
  %1655 = vmatpush1.xpose.msra.mxu0 0.0
  %1656 = vmatprep.subr.mxu0 0.0
  %1657 = vmatpush1.xpose.msra.mxu0 0.0
  %1658 = vmatprep.subr.mxu0 0.0
  %1659 = vmatpush1.xpose.msra.mxu0 0.0
  %1660 = vmatprep.subr.mxu0 0.0
  %1661 = vmatpush1.xpose.msra.mxu0 0.0
  %1662 = vmatprep.subr.mxu0 0.0
  %1663 = vmatpush1.xpose.msra.mxu0 0.0
  %1664 = vmatprep.subr.mxu0 0.0
  %1665 = vmatpush1.xpose.msra.mxu0 0.0
  %1666 = vmatprep.subr.mxu0 0.0
  %1667 = vmatpush1.xpose.msra.mxu0 0.0
  %1668 = vmatprep.subr.mxu0 0.0
  %1669 = vmatpush1.xpose.msra.mxu0 0.0
  %1670 = vmatprep.subr.mxu0 0.0
  %1671 = vmatpush1.xpose.msra.mxu0 0.0
  %1672 = vmatprep.subr.mxu0 0.0
  %1673 = vmatpush1.xpose.msra.mxu0 0.0
  %1674 = vmatprep.subr.mxu0 0.0
  %1675 = vmatpush1.xpose.msra.mxu0 0.0
  %1676 = vmatprep.subr.mxu0 0.0
  %1677 = vmatpush1.xpose.msra.mxu0 0.0
  %1678 = vmatprep.subr.mxu0 0.0
  %1679 = vmatpush1.xpose.msra.mxu0 0.0
  %1680 = vmatprep.subr.mxu0 0.0
  %1681 = vmatpush1.xpose.msra.mxu0 0.0
  %1682 = vmatprep.subr.mxu0 0.0
  %1683 = vmatpush1.xpose.msra.mxu0 0.0
  %1684 = vmatprep.subr.mxu0 0.0
  %1685 = vmatpush1.xpose.msra.mxu0 0.0
  %1686 = vmatprep.subr.mxu0 0.0
  %1687 = vmatpush1.xpose.msra.mxu0 0.0
  %1688 = vmatprep.subr.mxu0 0.0
  %1689 = vmatpush1.xpose.msra.mxu0 0.0
  %1690 = vmatprep.subr.mxu0 0.0
  %1691 = vmatpush1.xpose.msra.mxu0 0.0
  %1692 = vmatprep.subr.mxu0 0.0
  %1693 = vmatpush1.xpose.msra.mxu0 0.0
  %1694 = vmatprep.subr.mxu0 0.0
  %1695 = vmatpush1.xpose.msra.mxu0 0.0
  %1696 = vmatprep.mubr.f32.mxu0 0.0
  %1697 = vmatmul.mubr.f32.gmra.mrb[0].mxu0 %v1627
  %v1698 = vpop.f32.mrb[0].mxu0
  %v1699 = vadd.f32 %v1624, %v1698
  %v1700 = vpop.f32.mrb[0].mxu0
  %1701 = vdwg.mxu0
  %vm1702 = vcmask 64512
  %v1703 = vsel %vm1702, %v1699, 0.0
  %1704 = vst [vmem:[%s10] sm:$0x1] %v1703
  // Predicated region
  $region42: #{_drrn_forward_core.1} parent=0 // pred_check
    _
  $region43: #{_drrn_forward_core.1} parent=0 // pred_check_branch
    %1706 = sbr.rel (0) target = $region45
  $region44: #{_drrn_forward_core.1} parent=0 // pred_region
    _
  $region45: #{_drrn_forward_core.1} parent=0 // pred_fallthru
    _
  // Predicated region
  $region46: #{_drrn_forward_core.1} parent=0 // pred_check
    _
  $region47: #{_drrn_forward_core.1} parent=0 // pred_check_branch
    %1708 = sbr.rel (0) target = $region49
  $region48: #{_drrn_forward_core.1} parent=0 // pred_region
    _
  $region49: #{_drrn_forward_core.1} parent=0 // pred_fallthru
    _

</llo_original>
